<compile_context>
chip_gen: v7x
topology: tpu7x:2x2x1
jax: 0.10.0
libtpu: 0.0.40
codegen_flags: <defaults>
</compile_context>

<pallas_src>
import math

import jax
import jax.numpy as jnp
from jax.experimental import pallas as pl
from jax.experimental.pallas import tpu as pltpu

# ----------------------------- configuration --------------------------------
B, S, D = 2, 8, 32          # batch, seq, d_model (small synthetic shapes)
BS = B * S                  # flattened token count
H = 4                       # nhead (fixed by the module)
HD = D // H                 # head_dim
DFF = 2048                  # nn.TransformerEncoderLayer default dim_feedforward
EPS = 1e-5                  # nn.LayerNorm default eps

# Packed small-parameter layout: one (N_SMALL_ROWS, D) f32 array, one row per
# (D,)-sized parameter.  Collapses ten tiny inputs into a single DMA.
(R_B_ENC, R_B_Q, R_B_K, R_B_V, R_B_OUT,
 R_LN1_G, R_LN1_B, R_B2, R_LN2_G, R_LN2_B) = range(10)
N_SMALL_ROWS = 10


# ------------------------------- kernel --------------------------------------
def _layernorm(x, g, b):
    mu = jnp.mean(x, axis=-1, keepdims=True)
    var = jnp.mean((x - mu) ** 2, axis=-1, keepdims=True)
    return (x - mu) * jax.lax.rsqrt(var + EPS) * g + b


def _mm(x_f32, w_bf16):
    # bf16 MXU matmul with f32 accumulation; VPU-side math stays in f32.
    return jnp.dot(x_f32.astype(jnp.bfloat16), w_bf16,
                   preferred_element_type=jnp.float32)


def trans_backbone_kernel(x_ref, w_enc_ref, w_qkv_ref, w_out_ref,
                          w1_ref, b1_ref, w2_ref, small_ref, o_ref):
    x = x_ref[...]                                    # (BS, D) f32
    sm = small_ref[...]                               # (N_SMALL_ROWS, D) f32

    def row(r):                                       # (1, D) sublane slice
        return sm[r:r + 1, :]

    # 1) self.enccoder : Linear(d_model, d_model)
    h = _mm(x, w_enc_ref[...]) + row(R_B_ENC)         # (BS, D)

    # 2) multi-head self-attention (nhead=4); dropout is identity in eval mode
    qkv = _mm(h, w_qkv_ref[...])                      # (BS, 3D), bias added below
    scale = 1.0 / math.sqrt(HD)
    q = (qkv[:, 0 * D:1 * D] + row(R_B_Q)) * scale
    k = qkv[:, 1 * D:2 * D] + row(R_B_K)
    v = qkv[:, 2 * D:3 * D] + row(R_B_V)

    # Attention over all BS tokens at once with a same-batch mask.  Only 2-D
    # matmuls and lane slices -- no (B, S, HD) reshapes / relayouts.
    ri = jax.lax.broadcasted_iota(jnp.int32, (BS, BS), 0)
    ci = jax.lax.broadcasted_iota(jnp.int32, (BS, BS), 1)
    if S & (S - 1) == 0:                              # power-of-two seq len
        same_batch = (ri & -S) == (ci & -S)
    else:
        same_batch = (ri // S) == (ci // S)

    ctx_heads = []
    for hh in range(H):                               # H = 4, static unroll
        sl = slice(hh * HD, (hh + 1) * HD)
        qh, kh, vh = q[:, sl], k[:, sl], v[:, sl]     # (BS, HD) lane slices
        sc = jax.lax.dot_general(qh, kh, (((1,), (1,)), ((), ())),
                                 preferred_element_type=jnp.float32)
        sc = jnp.where(same_batch, sc, -1e30)         # mask cross-batch pairs
        sc = sc - jnp.max(sc, axis=-1, keepdims=True)
        p = jnp.exp(sc)
        p = p * pl.reciprocal(jnp.sum(p, axis=-1, keepdims=True), approx=True)
        ctx_heads.append(jnp.dot(p, vh, preferred_element_type=jnp.float32))
    ctx = jnp.concatenate(ctx_heads, axis=-1)         # (BS, D)
    attn = _mm(ctx, w_out_ref[...]) + row(R_B_OUT)    # single output projection

    # 3) residual + LayerNorm1 (norm_first=False -> post-norm)
    y = _layernorm(h + attn, row(R_LN1_G), row(R_LN1_B))

    # 4) feed-forward: Linear(D, 2048) -> ReLU -> Linear(2048, D)
    f = jnp.maximum(_mm(y, w1_ref[...]) + b1_ref[...], 0.0)
    # w2 kept lane-dense in PyTorch (D, DFF) layout; contract over DFF.
    f2 = jax.lax.dot_general(f.astype(jnp.bfloat16), w2_ref[...],
                             (((1,), (1,)), ((), ())),
                             preferred_element_type=jnp.float32) + row(R_B2)

    # 5) residual + LayerNorm2
    z = _layernorm(y + f2, row(R_LN2_G), row(R_LN2_B))
    o_ref[...] = z.astype(o_ref.dtype)


# ------------------------------- wrapper --------------------------------------
def _cost_estimate():
    mm_flops = 2 * BS * (D * D + D * 3 * D + D * D + 2 * D * DFF)
    attn_flops = 2 * H * (2 * BS * BS * HD)
    transcendentals = H * BS * BS + 4 * BS
    weight_bytes = 2 * (D * D + D * 3 * D + D * D + 2 * D * DFF)      # bf16
    act_bytes = 4 * (2 * BS * D + DFF + N_SMALL_ROWS * D)             # f32
    return pl.CostEstimate(flops=mm_flops + attn_flops,
                           transcendentals=transcendentals,
                           bytes_accessed=weight_bytes + act_bytes)


@jax.jit
def trans_backbone(x, kp):
    """x: (B, S, D) f32; kp: prepare_params() output (weights pre-cast to bf16)."""
    x_flat = x.reshape(BS, D)                          # free, contiguous
    out_flat = pl.pallas_call(
        trans_backbone_kernel,
        out_shape=jax.ShapeDtypeStruct((BS, D), x.dtype),
        in_specs=[pl.BlockSpec(memory_space=pltpu.MemorySpace.VMEM)
                  for _ in range(8)],
        out_specs=pl.BlockSpec(memory_space=pltpu.MemorySpace.VMEM),
        compiler_params=pltpu.CompilerParams(vmem_limit_bytes=8 << 20),
        cost_estimate=_cost_estimate(),
    )(x_flat, kp["w_enc"], kp["w_qkv"], kp["w_out"],
      kp["w1"], kp["b1"], kp["w2"], kp["small"])
    # == Results_Obj.last_hidden_state (host-side wrapper object not modeled)
    return out_flat.reshape(B, S, D)


# --------------------------- parameter init -----------------------------------
def init_params(key):
    ks = jax.random.split(key, 8)
    scale = 0.05

    def rnd(k, shape):
        return (scale * jax.random.normal(k, shape)).astype(jnp.float32)

    # Matmul weights stored pre-transposed (kernel computes x @ W_t == x @ W.T)
    # except w2, kept in PyTorch (out, in) layout so its long DFF axis is
    # lane-dense.
    return {
        "w_enc_t": rnd(ks[0], (D, D)),
        "b_enc":   rnd(ks[1], (1, D)),
        "w_qkv_t": rnd(ks[2], (D, 3 * D)),
        "b_qkv":   rnd(ks[3], (1, 3 * D)),
        "w_out_t": rnd(ks[4], (D, D)),
        "b_out":   rnd(ks[5], (1, D)),
        "ln1_g":   jnp.ones((1, D), jnp.float32),
        "ln1_b":   jnp.zeros((1, D), jnp.float32),
        "w1_t":    rnd(ks[6], (D, DFF)),
        "b1":      jnp.zeros((1, DFF), jnp.float32),
        "w2":      rnd(ks[7], (D, DFF)),               # PyTorch Linear(DFF, D) layout
        "b2":      jnp.zeros((1, D), jnp.float32),
        "ln2_g":   jnp.ones((1, D), jnp.float32),
        "ln2_b":   jnp.zeros((1, D), jnp.float32),
    }


def prepare_params(p):
    """One-time host-side prep: cast matmul weights to bf16 and pack the ten
    (D,)-sized f32 params into a single (N_SMALL_ROWS, D) array."""
    small = jnp.concatenate(
        [p["b_enc"],
         p["b_qkv"][:, 0:D], p["b_qkv"][:, D:2 * D], p["b_qkv"][:, 2 * D:3 * D],
         p["b_out"], p["ln1_g"], p["ln1_b"], p["b2"], p["ln2_g"], p["ln2_b"]],
        axis=0).astype(jnp.float32)                    # (N_SMALL_ROWS, D)
    return {
        "w_enc": p["w_enc_t"].astype(jnp.bfloat16),
        "w_qkv": p["w_qkv_t"].astype(jnp.bfloat16),
        "w_out": p["w_out_t"].astype(jnp.bfloat16),
        "w1":    p["w1_t"].astype(jnp.bfloat16),
        "b1":    p["b1"],
        "w2":    p["w2"].astype(jnp.bfloat16),
        "small": small,
    }


# ------------------------- pure-JAX reference ---------------------------------
# Mirrors the kernel's matmul precision (bf16 inputs, f32 accumulation) so the
# comparison isolates kernel bugs rather than quantization differences.
def reference(x, p):
    bf = jnp.bfloat16

    def mm(a, w):
        return jnp.dot(a.astype(bf), w.astype(bf),
                       preferred_element_type=jnp.float32)

    def ln(v, g, b):
        mu = v.mean(-1, keepdims=True)
        var = ((v - mu) ** 2).mean(-1, keepdims=True)
        return (v - mu) / jnp.sqrt(var + EPS) * g + b

    h = mm(x, p["w_enc_t"]) + p["b_enc"]
    qkv = mm(h, p["w_qkv_t"]) + p["b_qkv"]
    q, k, v = jnp.split(qkv, 3, axis=-1)
    qh = q.reshape(B, S, H, HD).transpose(0, 2, 1, 3)
    kh = k.reshape(B, S, H, HD).transpose(0, 2, 1, 3)
    vh = v.reshape(B, S, H, HD).transpose(0, 2, 1, 3)
    sc = jnp.einsum("bhqd,bhkd->bhqk", qh, kh) / math.sqrt(HD)
    pw = jax.nn.softmax(sc, axis=-1)
    ctx = jnp.einsum("bhqk,bhkd->bhqd", pw, vh).transpose(0, 2, 1, 3).reshape(B, S, D)
    attn = mm(ctx, p["w_out_t"]) + p["b_out"]
    y = ln(h + attn, p["ln1_g"], p["ln1_b"])
    f = jnp.maximum(mm(y, p["w1_t"]) + p["b1"], 0.0)
    f2 = jnp.dot(f.astype(bf), p["w2"].astype(bf).T,
                 preferred_element_type=jnp.float32) + p["b2"]
    return ln(y + f2, p["ln2_g"], p["ln2_b"])


# --------------------------------- main ----------------------------------------
if __name__ == "__main__":
    key = jax.random.PRNGKey(0)
    k_x, k_p = jax.random.split(key)
    inputs_embeds = jax.random.normal(k_x, (B, S, D), dtype=jnp.float32)
    params = init_params(k_p)
    kparams = prepare_params(params)                   # one-time bf16 cast / packing

    out = jax.block_until_ready(trans_backbone(inputs_embeds, kparams))
    ref = jax.block_until_ready(reference(inputs_embeds, params))

    assert out.shape == (B, S, D)
    max_err = float(jnp.max(jnp.abs(out - ref)))
    assert jnp.allclose(out, ref, atol=2e-2, rtol=2e-2), max_err

    print("KERNEL_OK")
</pallas_src>

<mosaic_0001>
module attributes {stable_mosaic.version = 11 : i64} {
  func.func @trans_backbone_kernel(%arg0: memref<16x32xf32, #tpu.memory_space<vmem>>, %arg1: memref<32x32xbf16, #tpu.memory_space<vmem>>, %arg2: memref<32x96xbf16, #tpu.memory_space<vmem>>, %arg3: memref<32x32xbf16, #tpu.memory_space<vmem>>, %arg4: memref<32x2048xbf16, #tpu.memory_space<vmem>>, %arg5: memref<1x2048xf32, #tpu.memory_space<vmem>>, %arg6: memref<32x2048xbf16, #tpu.memory_space<vmem>>, %arg7: memref<10x32xf32, #tpu.memory_space<vmem>>, %arg8: memref<16x32xf32, #tpu.memory_space<vmem>>) attributes {dimension_semantics = [], scalar_prefetch = 0 : i64, scratch_operands = 0 : i64, tpu.core_type = #tpu.core_type<tc>} {
    %c0 = arith.constant 0 : index
    %c0_0 = arith.constant 0 : index
    %0 = vector.load %arg0[%c0, %c0_0] : memref<16x32xf32, #tpu.memory_space<vmem>>, vector<16x32xf32>
    %c0_1 = arith.constant 0 : index
    %c0_2 = arith.constant 0 : index
    %1 = vector.load %arg7[%c0_1, %c0_2] : memref<10x32xf32, #tpu.memory_space<vmem>>, vector<10x32xf32>
    %c0_3 = arith.constant 0 : index
    %c0_4 = arith.constant 0 : index
    %2 = vector.load %arg1[%c0_3, %c0_4] : memref<32x32xbf16, #tpu.memory_space<vmem>>, vector<32x32xbf16>
    %3 = arith.truncf %0 : vector<16x32xf32> to vector<16x32xbf16>
    %cst = arith.constant dense<0.000000e+00> : vector<16x32xf32>
    %4 = tpu.matmul %3, %2, %cst {dimension_numbers = #tpu.dot_dimension_numbers<[1], [0], [0], [1], [0, 0, 1, 1], [], []>} : vector<16x32xbf16>, vector<32x32xbf16>, vector<16x32xf32> -> vector<16x32xf32>
    %5 = vector.extract_strided_slice %1 {offsets = [0, 0], sizes = [1, 32], strides = [1, 1]} : vector<10x32xf32> to vector<1x32xf32>
    %6 = vector.broadcast %5 : vector<1x32xf32> to vector<16x32xf32>
    %7 = arith.addf %4, %6 : vector<16x32xf32>
    %c0_5 = arith.constant 0 : index
    %c0_6 = arith.constant 0 : index
    %8 = vector.load %arg2[%c0_5, %c0_6] : memref<32x96xbf16, #tpu.memory_space<vmem>>, vector<32x96xbf16>
    %9 = arith.truncf %7 : vector<16x32xf32> to vector<16x32xbf16>
    %cst_7 = arith.constant dense<0.000000e+00> : vector<16x96xf32>
    %10 = tpu.matmul %9, %8, %cst_7 {dimension_numbers = #tpu.dot_dimension_numbers<[1], [0], [0], [1], [0, 0, 1, 1], [], []>} : vector<16x32xbf16>, vector<32x96xbf16>, vector<16x96xf32> -> vector<16x96xf32>
    %11 = vector.extract_strided_slice %10 {offsets = [0, 0], sizes = [16, 32], strides = [1, 1]} : vector<16x96xf32> to vector<16x32xf32>
    %12 = vector.extract_strided_slice %1 {offsets = [1, 0], sizes = [1, 32], strides = [1, 1]} : vector<10x32xf32> to vector<1x32xf32>
    %13 = vector.broadcast %12 : vector<1x32xf32> to vector<16x32xf32>
    %14 = arith.addf %11, %13 : vector<16x32xf32>
    %cst_8 = arith.constant 0.353553385 : f32
    %15 = vector.broadcast %cst_8 : f32 to vector<16x32xf32>
    %16 = arith.mulf %14, %15 : vector<16x32xf32>
    %17 = vector.extract_strided_slice %10 {offsets = [0, 32], sizes = [16, 32], strides = [1, 1]} : vector<16x96xf32> to vector<16x32xf32>
    %18 = vector.extract_strided_slice %1 {offsets = [2, 0], sizes = [1, 32], strides = [1, 1]} : vector<10x32xf32> to vector<1x32xf32>
    %19 = vector.broadcast %18 : vector<1x32xf32> to vector<16x32xf32>
    %20 = arith.addf %17, %19 : vector<16x32xf32>
    %21 = vector.extract_strided_slice %10 {offsets = [0, 64], sizes = [16, 32], strides = [1, 1]} : vector<16x96xf32> to vector<16x32xf32>
    %22 = vector.extract_strided_slice %1 {offsets = [3, 0], sizes = [1, 32], strides = [1, 1]} : vector<10x32xf32> to vector<1x32xf32>
    %23 = vector.broadcast %22 : vector<1x32xf32> to vector<16x32xf32>
    %24 = arith.addf %21, %23 : vector<16x32xf32>
    %25 = tpu.iota {dimensions = array<i32: 0>} : vector<16x16xi32>
    %26 = tpu.iota {dimensions = array<i32: 1>} : vector<16x16xi32>
    %c-8_i32 = arith.constant -8 : i32
    %27 = vector.broadcast %c-8_i32 : i32 to vector<16x16xi32>
    %28 = arith.andi %25, %27 : vector<16x16xi32>
    %c-8_i32_9 = arith.constant -8 : i32
    %29 = vector.broadcast %c-8_i32_9 : i32 to vector<16x16xi32>
    %30 = arith.andi %26, %29 : vector<16x16xi32>
    %31 = arith.cmpi eq, %28, %30 : vector<16x16xi32>
    %32 = vector.extract_strided_slice %16 {offsets = [0, 0], sizes = [16, 8], strides = [1, 1]} : vector<16x32xf32> to vector<16x8xf32>
    %33 = vector.extract_strided_slice %20 {offsets = [0, 0], sizes = [16, 8], strides = [1, 1]} : vector<16x32xf32> to vector<16x8xf32>
    %34 = vector.extract_strided_slice %24 {offsets = [0, 0], sizes = [16, 8], strides = [1, 1]} : vector<16x32xf32> to vector<16x8xf32>
    %cst_10 = arith.constant dense<0.000000e+00> : vector<16x16xf32>
    %35 = tpu.matmul %32, %33, %cst_10 {dimension_numbers = #tpu.dot_dimension_numbers<[1], [1], [0], [0], [0, 0, 1, 0], [], []>} : vector<16x8xf32>, vector<16x8xf32>, vector<16x16xf32> -> vector<16x16xf32>
    %cst_11 = arith.constant -1.000000e+30 : f32
    %36 = vector.broadcast %cst_11 : f32 to vector<16x16xf32>
    %37 = arith.select %31, %35, %36 : vector<16x16xi1>, vector<16x16xf32>
    %cst_12 = arith.constant dense<0xFF800000> : vector<16xf32>
    %38 = vector.multi_reduction <maximumf>, %37, %cst_12 [1] : vector<16x16xf32> to vector<16xf32>
    %39 = vector.shape_cast %38 : vector<16xf32> to vector<16x1xf32>
    %40 = vector.broadcast %39 : vector<16x1xf32> to vector<16x16xf32>
    %41 = arith.subf %37, %40 : vector<16x16xf32>
    %42 = math.exp %41 : vector<16x16xf32>
    %cst_13 = arith.constant dense<0.000000e+00> : vector<16xf32>
    %43 = vector.multi_reduction <add>, %42, %cst_13 [1] : vector<16x16xf32> to vector<16xf32>
    %44 = vector.shape_cast %43 : vector<16xf32> to vector<16x1xf32>
    %45 = tpu.reciprocal %44 {approx = true} : vector<16x1xf32> -> vector<16x1xf32>
    %46 = vector.broadcast %45 : vector<16x1xf32> to vector<16x16xf32>
    %47 = arith.mulf %42, %46 : vector<16x16xf32>
    %cst_14 = arith.constant dense<0.000000e+00> : vector<16x8xf32>
    %48 = tpu.matmul %47, %34, %cst_14 {dimension_numbers = #tpu.dot_dimension_numbers<[1], [0], [0], [1], [0, 0, 1, 1], [], []>} : vector<16x16xf32>, vector<16x8xf32>, vector<16x8xf32> -> vector<16x8xf32>
    %49 = vector.extract_strided_slice %16 {offsets = [0, 8], sizes = [16, 8], strides = [1, 1]} : vector<16x32xf32> to vector<16x8xf32>
    %50 = vector.extract_strided_slice %20 {offsets = [0, 8], sizes = [16, 8], strides = [1, 1]} : vector<16x32xf32> to vector<16x8xf32>
    %51 = vector.extract_strided_slice %24 {offsets = [0, 8], sizes = [16, 8], strides = [1, 1]} : vector<16x32xf32> to vector<16x8xf32>
    %cst_15 = arith.constant dense<0.000000e+00> : vector<16x16xf32>
    %52 = tpu.matmul %49, %50, %cst_15 {dimension_numbers = #tpu.dot_dimension_numbers<[1], [1], [0], [0], [0, 0, 1, 0], [], []>} : vector<16x8xf32>, vector<16x8xf32>, vector<16x16xf32> -> vector<16x16xf32>
    %cst_16 = arith.constant -1.000000e+30 : f32
    %53 = vector.broadcast %cst_16 : f32 to vector<16x16xf32>
    %54 = arith.select %31, %52, %53 : vector<16x16xi1>, vector<16x16xf32>
    %cst_17 = arith.constant dense<0xFF800000> : vector<16xf32>
    %55 = vector.multi_reduction <maximumf>, %54, %cst_17 [1] : vector<16x16xf32> to vector<16xf32>
    %56 = vector.shape_cast %55 : vector<16xf32> to vector<16x1xf32>
    %57 = vector.broadcast %56 : vector<16x1xf32> to vector<16x16xf32>
    %58 = arith.subf %54, %57 : vector<16x16xf32>
    %59 = math.exp %58 : vector<16x16xf32>
    %cst_18 = arith.constant dense<0.000000e+00> : vector<16xf32>
    %60 = vector.multi_reduction <add>, %59, %cst_18 [1] : vector<16x16xf32> to vector<16xf32>
    %61 = vector.shape_cast %60 : vector<16xf32> to vector<16x1xf32>
    %62 = tpu.reciprocal %61 {approx = true} : vector<16x1xf32> -> vector<16x1xf32>
    %63 = vector.broadcast %62 : vector<16x1xf32> to vector<16x16xf32>
    %64 = arith.mulf %59, %63 : vector<16x16xf32>
    %cst_19 = arith.constant dense<0.000000e+00> : vector<16x8xf32>
    %65 = tpu.matmul %64, %51, %cst_19 {dimension_numbers = #tpu.dot_dimension_numbers<[1], [0], [0], [1], [0, 0, 1, 1], [], []>} : vector<16x16xf32>, vector<16x8xf32>, vector<16x8xf32> -> vector<16x8xf32>
    %66 = vector.extract_strided_slice %16 {offsets = [0, 16], sizes = [16, 8], strides = [1, 1]} : vector<16x32xf32> to vector<16x8xf32>
    %67 = vector.extract_strided_slice %20 {offsets = [0, 16], sizes = [16, 8], strides = [1, 1]} : vector<16x32xf32> to vector<16x8xf32>
    %68 = vector.extract_strided_slice %24 {offsets = [0, 16], sizes = [16, 8], strides = [1, 1]} : vector<16x32xf32> to vector<16x8xf32>
    %cst_20 = arith.constant dense<0.000000e+00> : vector<16x16xf32>
    %69 = tpu.matmul %66, %67, %cst_20 {dimension_numbers = #tpu.dot_dimension_numbers<[1], [1], [0], [0], [0, 0, 1, 0], [], []>} : vector<16x8xf32>, vector<16x8xf32>, vector<16x16xf32> -> vector<16x16xf32>
    %cst_21 = arith.constant -1.000000e+30 : f32
    %70 = vector.broadcast %cst_21 : f32 to vector<16x16xf32>
    %71 = arith.select %31, %69, %70 : vector<16x16xi1>, vector<16x16xf32>
    %cst_22 = arith.constant dense<0xFF800000> : vector<16xf32>
    %72 = vector.multi_reduction <maximumf>, %71, %cst_22 [1] : vector<16x16xf32> to vector<16xf32>
    %73 = vector.shape_cast %72 : vector<16xf32> to vector<16x1xf32>
    %74 = vector.broadcast %73 : vector<16x1xf32> to vector<16x16xf32>
    %75 = arith.subf %71, %74 : vector<16x16xf32>
    %76 = math.exp %75 : vector<16x16xf32>
    %cst_23 = arith.constant dense<0.000000e+00> : vector<16xf32>
    %77 = vector.multi_reduction <add>, %76, %cst_23 [1] : vector<16x16xf32> to vector<16xf32>
    %78 = vector.shape_cast %77 : vector<16xf32> to vector<16x1xf32>
    %79 = tpu.reciprocal %78 {approx = true} : vector<16x1xf32> -> vector<16x1xf32>
    %80 = vector.broadcast %79 : vector<16x1xf32> to vector<16x16xf32>
    %81 = arith.mulf %76, %80 : vector<16x16xf32>
    %cst_24 = arith.constant dense<0.000000e+00> : vector<16x8xf32>
    %82 = tpu.matmul %81, %68, %cst_24 {dimension_numbers = #tpu.dot_dimension_numbers<[1], [0], [0], [1], [0, 0, 1, 1], [], []>} : vector<16x16xf32>, vector<16x8xf32>, vector<16x8xf32> -> vector<16x8xf32>
    %83 = vector.extract_strided_slice %16 {offsets = [0, 24], sizes = [16, 8], strides = [1, 1]} : vector<16x32xf32> to vector<16x8xf32>
    %84 = vector.extract_strided_slice %20 {offsets = [0, 24], sizes = [16, 8], strides = [1, 1]} : vector<16x32xf32> to vector<16x8xf32>
    %85 = vector.extract_strided_slice %24 {offsets = [0, 24], sizes = [16, 8], strides = [1, 1]} : vector<16x32xf32> to vector<16x8xf32>
    %cst_25 = arith.constant dense<0.000000e+00> : vector<16x16xf32>
    %86 = tpu.matmul %83, %84, %cst_25 {dimension_numbers = #tpu.dot_dimension_numbers<[1], [1], [0], [0], [0, 0, 1, 0], [], []>} : vector<16x8xf32>, vector<16x8xf32>, vector<16x16xf32> -> vector<16x16xf32>
    %cst_26 = arith.constant -1.000000e+30 : f32
    %87 = vector.broadcast %cst_26 : f32 to vector<16x16xf32>
    %88 = arith.select %31, %86, %87 : vector<16x16xi1>, vector<16x16xf32>
    %cst_27 = arith.constant dense<0xFF800000> : vector<16xf32>
    %89 = vector.multi_reduction <maximumf>, %88, %cst_27 [1] : vector<16x16xf32> to vector<16xf32>
    %90 = vector.shape_cast %89 : vector<16xf32> to vector<16x1xf32>
    %91 = vector.broadcast %90 : vector<16x1xf32> to vector<16x16xf32>
    %92 = arith.subf %88, %91 : vector<16x16xf32>
    %93 = math.exp %92 : vector<16x16xf32>
    %cst_28 = arith.constant dense<0.000000e+00> : vector<16xf32>
    %94 = vector.multi_reduction <add>, %93, %cst_28 [1] : vector<16x16xf32> to vector<16xf32>
    %95 = vector.shape_cast %94 : vector<16xf32> to vector<16x1xf32>
    %96 = tpu.reciprocal %95 {approx = true} : vector<16x1xf32> -> vector<16x1xf32>
    %97 = vector.broadcast %96 : vector<16x1xf32> to vector<16x16xf32>
    %98 = arith.mulf %93, %97 : vector<16x16xf32>
    %cst_29 = arith.constant dense<0.000000e+00> : vector<16x8xf32>
    %99 = tpu.matmul %98, %85, %cst_29 {dimension_numbers = #tpu.dot_dimension_numbers<[1], [0], [0], [1], [0, 0, 1, 1], [], []>} : vector<16x16xf32>, vector<16x8xf32>, vector<16x8xf32> -> vector<16x8xf32>
    %100 = tpu.concatenate %48, %65, %82, %99 in 1 : vector<16x8xf32>, vector<16x8xf32>, vector<16x8xf32>, vector<16x8xf32> -> vector<16x32xf32>
    %c0_30 = arith.constant 0 : index
    %c0_31 = arith.constant 0 : index
    %101 = vector.load %arg3[%c0_30, %c0_31] : memref<32x32xbf16, #tpu.memory_space<vmem>>, vector<32x32xbf16>
    %102 = arith.truncf %100 : vector<16x32xf32> to vector<16x32xbf16>
    %cst_32 = arith.constant dense<0.000000e+00> : vector<16x32xf32>
    %103 = tpu.matmul %102, %101, %cst_32 {dimension_numbers = #tpu.dot_dimension_numbers<[1], [0], [0], [1], [0, 0, 1, 1], [], []>} : vector<16x32xbf16>, vector<32x32xbf16>, vector<16x32xf32> -> vector<16x32xf32>
    %104 = vector.extract_strided_slice %1 {offsets = [4, 0], sizes = [1, 32], strides = [1, 1]} : vector<10x32xf32> to vector<1x32xf32>
    %105 = vector.broadcast %104 : vector<1x32xf32> to vector<16x32xf32>
    %106 = arith.addf %103, %105 : vector<16x32xf32>
    %107 = arith.addf %7, %106 : vector<16x32xf32>
    %108 = vector.extract_strided_slice %1 {offsets = [5, 0], sizes = [1, 32], strides = [1, 1]} : vector<10x32xf32> to vector<1x32xf32>
    %109 = vector.extract_strided_slice %1 {offsets = [6, 0], sizes = [1, 32], strides = [1, 1]} : vector<10x32xf32> to vector<1x32xf32>
    %cst_33 = arith.constant dense<0.000000e+00> : vector<16xf32>
    %110 = vector.multi_reduction <add>, %107, %cst_33 [1] : vector<16x32xf32> to vector<16xf32>
    %111 = vector.shape_cast %110 : vector<16xf32> to vector<16x1xf32>
    %cst_34 = arith.constant 3.200000e+01 : f32
    %112 = vector.broadcast %cst_34 : f32 to vector<16x1xf32>
    %113 = arith.divf %111, %112 : vector<16x1xf32>
    %114 = vector.broadcast %113 : vector<16x1xf32> to vector<16x32xf32>
    %115 = arith.subf %107, %114 : vector<16x32xf32>
    %116 = arith.mulf %115, %115 : vector<16x32xf32>
    %cst_35 = arith.constant dense<0.000000e+00> : vector<16xf32>
    %117 = vector.multi_reduction <add>, %116, %cst_35 [1] : vector<16x32xf32> to vector<16xf32>
    %118 = vector.shape_cast %117 : vector<16xf32> to vector<16x1xf32>
    %cst_36 = arith.constant 3.200000e+01 : f32
    %119 = vector.broadcast %cst_36 : f32 to vector<16x1xf32>
    %120 = arith.divf %118, %119 : vector<16x1xf32>
    %121 = vector.broadcast %113 : vector<16x1xf32> to vector<16x32xf32>
    %122 = arith.subf %107, %121 : vector<16x32xf32>
    %cst_37 = arith.constant 9.99999974E-6 : f32
    %123 = vector.broadcast %cst_37 : f32 to vector<16x1xf32>
    %124 = arith.addf %120, %123 : vector<16x1xf32>
    %125 = math.rsqrt %124 : vector<16x1xf32>
    %126 = vector.broadcast %125 : vector<16x1xf32> to vector<16x32xf32>
    %127 = arith.mulf %122, %126 : vector<16x32xf32>
    %128 = vector.broadcast %108 : vector<1x32xf32> to vector<16x32xf32>
    %129 = arith.mulf %127, %128 : vector<16x32xf32>
    %130 = vector.broadcast %109 : vector<1x32xf32> to vector<16x32xf32>
    %131 = arith.addf %129, %130 : vector<16x32xf32>
    %c0_38 = arith.constant 0 : index
    %c0_39 = arith.constant 0 : index
    %132 = vector.load %arg4[%c0_38, %c0_39] : memref<32x2048xbf16, #tpu.memory_space<vmem>>, vector<32x2048xbf16>
    %133 = arith.truncf %131 : vector<16x32xf32> to vector<16x32xbf16>
    %cst_40 = arith.constant dense<0.000000e+00> : vector<16x2048xf32>
    %134 = tpu.matmul %133, %132, %cst_40 {dimension_numbers = #tpu.dot_dimension_numbers<[1], [0], [0], [1], [0, 0, 1, 1], [], []>} : vector<16x32xbf16>, vector<32x2048xbf16>, vector<16x2048xf32> -> vector<16x2048xf32>
    %c0_41 = arith.constant 0 : index
    %c0_42 = arith.constant 0 : index
    %135 = vector.load %arg5[%c0_41, %c0_42] : memref<1x2048xf32, #tpu.memory_space<vmem>>, vector<1x2048xf32>
    %136 = vector.broadcast %135 : vector<1x2048xf32> to vector<16x2048xf32>
    %137 = arith.addf %134, %136 : vector<16x2048xf32>
    %cst_43 = arith.constant 0.000000e+00 : f32
    %138 = vector.broadcast %cst_43 : f32 to vector<16x2048xf32>
    %139 = arith.maximumf %137, %138 : vector<16x2048xf32>
    %140 = arith.truncf %139 : vector<16x2048xf32> to vector<16x2048xbf16>
    %c0_44 = arith.constant 0 : index
    %c0_45 = arith.constant 0 : index
    %141 = vector.load %arg6[%c0_44, %c0_45] : memref<32x2048xbf16, #tpu.memory_space<vmem>>, vector<32x2048xbf16>
    %cst_46 = arith.constant dense<0.000000e+00> : vector<16x32xf32>
    %142 = tpu.matmul %140, %141, %cst_46 {dimension_numbers = #tpu.dot_dimension_numbers<[1], [1], [0], [0], [0, 0, 1, 0], [], []>} : vector<16x2048xbf16>, vector<32x2048xbf16>, vector<16x32xf32> -> vector<16x32xf32>
    %143 = vector.extract_strided_slice %1 {offsets = [7, 0], sizes = [1, 32], strides = [1, 1]} : vector<10x32xf32> to vector<1x32xf32>
    %144 = vector.broadcast %143 : vector<1x32xf32> to vector<16x32xf32>
    %145 = arith.addf %142, %144 : vector<16x32xf32>
    %146 = arith.addf %131, %145 : vector<16x32xf32>
    %147 = vector.extract_strided_slice %1 {offsets = [8, 0], sizes = [1, 32], strides = [1, 1]} : vector<10x32xf32> to vector<1x32xf32>
    %148 = vector.extract_strided_slice %1 {offsets = [9, 0], sizes = [1, 32], strides = [1, 1]} : vector<10x32xf32> to vector<1x32xf32>
    %cst_47 = arith.constant dense<0.000000e+00> : vector<16xf32>
    %149 = vector.multi_reduction <add>, %146, %cst_47 [1] : vector<16x32xf32> to vector<16xf32>
    %150 = vector.shape_cast %149 : vector<16xf32> to vector<16x1xf32>
    %cst_48 = arith.constant 3.200000e+01 : f32
    %151 = vector.broadcast %cst_48 : f32 to vector<16x1xf32>
    %152 = arith.divf %150, %151 : vector<16x1xf32>
    %153 = vector.broadcast %152 : vector<16x1xf32> to vector<16x32xf32>
    %154 = arith.subf %146, %153 : vector<16x32xf32>
    %155 = arith.mulf %154, %154 : vector<16x32xf32>
    %cst_49 = arith.constant dense<0.000000e+00> : vector<16xf32>
    %156 = vector.multi_reduction <add>, %155, %cst_49 [1] : vector<16x32xf32> to vector<16xf32>
    %157 = vector.shape_cast %156 : vector<16xf32> to vector<16x1xf32>
    %cst_50 = arith.constant 3.200000e+01 : f32
    %158 = vector.broadcast %cst_50 : f32 to vector<16x1xf32>
    %159 = arith.divf %157, %158 : vector<16x1xf32>
    %160 = vector.broadcast %152 : vector<16x1xf32> to vector<16x32xf32>
    %161 = arith.subf %146, %160 : vector<16x32xf32>
    %cst_51 = arith.constant 9.99999974E-6 : f32
    %162 = vector.broadcast %cst_51 : f32 to vector<16x1xf32>
    %163 = arith.addf %159, %162 : vector<16x1xf32>
    %164 = math.rsqrt %163 : vector<16x1xf32>
    %165 = vector.broadcast %164 : vector<16x1xf32> to vector<16x32xf32>
    %166 = arith.mulf %161, %165 : vector<16x32xf32>
    %167 = vector.broadcast %147 : vector<1x32xf32> to vector<16x32xf32>
    %168 = arith.mulf %166, %167 : vector<16x32xf32>
    %169 = vector.broadcast %148 : vector<1x32xf32> to vector<16x32xf32>
    %170 = arith.addf %168, %169 : vector<16x32xf32>
    %c0_52 = arith.constant 0 : index
    %c0_53 = arith.constant 0 : index
    %171 = vector.load %arg8[%c0_52, %c0_53] : memref<16x32xf32, #tpu.memory_space<vmem>>, vector<16x32xf32>
    tpu.vector_store %arg8[%c0_52, %c0_53], %170 {strides = array<i32>} : memref<16x32xf32, #tpu.memory_space<vmem>>, vector<16x32xf32>,
    return
  }
}

</mosaic_0001>

<llo_original>
// kernel: trans_backbone.1
$region0: #{trans_backbone.1}
  #allocation0 [shape = 'u32[]', space=smem, size = 0x4, offset = 0x4, fixed_abs, tag = 'smem constant byte address 0x4 - core index']
  #allocation1 [shape = 'u32[144,128]{1,0:T(1,128)}', space=vmem, size = 0x12000, scoped, tag = 'internal scratch']
  %s0 = inlined_call_operand.hbm [shape: f32[16,32], index: 0, kind: input, shape index: {}]
  %s1 = inlined_call_operand.vmem [shape: bf16[32,32], index: 1, kind: input, shape index: {}]
  %s2 = inlined_call_operand.hbm [shape: bf16[32,96], index: 2, kind: input, shape index: {}]
  %s3 = inlined_call_operand.hbm [shape: bf16[32,32], index: 3, kind: input, shape index: {}]
  %s4 = inlined_call_operand.hbm [shape: bf16[32,2048], index: 4, kind: input, shape index: {}]
  %s5 = inlined_call_operand.hbm [shape: f32[1,2048], index: 5, kind: input, shape index: {}]
  %s6 = inlined_call_operand.hbm [shape: bf16[32,2048], index: 6, kind: input, shape index: {}]
  %s7 = inlined_call_operand.hbm [shape: f32[10,32], index: 7, kind: input, shape index: {}]
  %s8 = inlined_call_operand.hbm [shape: f32[16,32], index: 8, kind: output, shape index: {}]
  %s9 = sld [smem:[#allocation0]]
  $region70: #{trans_backbone.1} parent=0
    _
  %s11 = ssub.s32 1, %s9
  %s12 = scalar_select 0, %s11, %s9
  $region1: #{trans_backbone.1} parent=0
    #allocation2 [shape = 'u8[8192]{0}', space=vmem, size = 0x2000, scoped, tag = 'input window, operand 0, single buffered']
    #allocation3 [shape = 's32[1]{0}', space=sflag, size = 0x4, scoped, tag = 'scoped memory for trans_backbone.1']
    #allocation4 [shape = 's32[1]{0}', space=sflag, size = 0x4, scoped, tag = 'scoped memory for trans_backbone.1']
    #allocation5 [shape = 'u8[8192]{0}', space=vmem, size = 0x2000, scoped, tag = 'input window, operand 2, single buffered']
    #allocation6 [shape = 's32[1]{0}', space=sflag, size = 0x4, scoped, tag = 'scoped memory for trans_backbone.1']
    #allocation7 [shape = 'u8[8192]{0}', space=vmem, size = 0x2000, scoped, tag = 'input window, operand 3, single buffered']
    #allocation8 [shape = 'u8[131072]{0}', space=vmem, size = 0x20000, scoped, tag = 'input window, operand 4, single buffered']
    #allocation9 [shape = 's32[1]{0}', space=sflag, size = 0x4, scoped, tag = 'scoped memory for trans_backbone.1']
    #allocation10 [shape = 'u8[8192]{0}', space=vmem, size = 0x2000, scoped, tag = 'input window, operand 5, single buffered']
    #allocation11 [shape = 'u8[131072]{0}', space=vmem, size = 0x20000, scoped, tag = 'input window, operand 6, single buffered']
    #allocation12 [shape = 's32[1]{0}', space=sflag, size = 0x4, scoped, tag = 'scoped memory for trans_backbone.1']
    #allocation13 [shape = 'u8[8192]{0}', space=vmem, size = 0x2000, scoped, tag = 'input window, operand 7, single buffered']
    #allocation14 [shape = 'u8[8192]{0}', space=vmem, size = 0x2000, scoped, tag = 'output window, operand 0, single buffered']
    %13 = vsyncpa [#allocation3], 0
    %14 = vsyncpa [#allocation6], 0
    %15 = vsyncpa [#allocation9], 0
    %16 = vsyncpa [#allocation12], 0
    %17 = vsyncpa [#allocation4], 0
    // Predicated region
    $region2: #{trans_backbone.1} parent=1 // pred_check
      _
    $region3: #{trans_backbone.1} parent=1 // pred_check_branch
      %19 = sbr.rel (0) target = $region5
    $region4: #{trans_backbone.1} parent=1 // pred_region
      %s21 = ssub.s32 256, 256
      %22 = vsyncadd [#allocation3], %s21
      %s23 = sshll.u32 [#allocation2], 4
      %s24 = int_to_ptr.vmem [resolvable:$true] %s23
      %29 = dma.hbm_to_vmem [thread:$0]  %s0, 256, %s24, [#allocation3], 128, 128, 8
    $region5: #{trans_backbone.1} parent=1 // pred_fallthru
      _
    // Predicated region
    $region6: #{trans_backbone.1} parent=1 // pred_check
      _
    $region7: #{trans_backbone.1} parent=1 // pred_check_branch
      %31 = sbr.rel (0) target = $region9
    $region8: #{trans_backbone.1} parent=1 // pred_region
      _
    $region9: #{trans_backbone.1} parent=1 // pred_fallthru
      _
    // Predicated region
    $region10: #{trans_backbone.1} parent=1 // pred_check
      _
    $region11: #{trans_backbone.1} parent=1 // pred_check_branch
      %33 = sbr.rel (0) target = $region13
    $region12: #{trans_backbone.1} parent=1 // pred_region
      %s35 = ssub.s32 256, 256
      %36 = vsyncadd [#allocation6], %s35
      %s37 = sshll.u32 [#allocation5], 4
      %s38 = int_to_ptr.vmem [resolvable:$true] %s37
      %43 = dma.hbm_to_vmem [thread:$0]  %s2, 256, %s38, [#allocation6], 64, 64, 4
    $region13: #{trans_backbone.1} parent=1 // pred_fallthru
      _
    // Predicated region
    $region14: #{trans_backbone.1} parent=1 // pred_check
      _
    $region15: #{trans_backbone.1} parent=1 // pred_check_branch
      %45 = sbr.rel (0) target = $region17
    $region16: #{trans_backbone.1} parent=1 // pred_region
      %s47 = ssub.s32 256, 256
      %48 = vsyncadd [#allocation6], %s47
      %s49 = sshll.u32 [#allocation7], 4
      %s50 = int_to_ptr.vmem [resolvable:$true] %s49
      %55 = dma.hbm_to_vmem [thread:$0]  %s3, 256, %s50, [#allocation6], 64, 64, 4
    $region17: #{trans_backbone.1} parent=1 // pred_fallthru
      _
    // Predicated region
    $region18: #{trans_backbone.1} parent=1 // pred_check
      _
    $region19: #{trans_backbone.1} parent=1 // pred_check_branch
      %57 = sbr.rel (0) target = $region21
    $region20: #{trans_backbone.1} parent=1 // pred_region
      %s59 = ssub.s32 4096, 4096
      %60 = vsyncadd [#allocation9], %s59
      %s61 = sshll.u32 [#allocation8], 4
      %s62 = int_to_ptr.vmem [resolvable:$true] %s61
      %67 = dma.hbm_to_vmem [thread:$0]  %s4, 4096, %s62, [#allocation9], 1024, 1024, 64
    $region21: #{trans_backbone.1} parent=1 // pred_fallthru
      _
    // Predicated region
    $region22: #{trans_backbone.1} parent=1 // pred_check
      _
    $region23: #{trans_backbone.1} parent=1 // pred_check_branch
      %69 = sbr.rel (0) target = $region25
    $region24: #{trans_backbone.1} parent=1 // pred_region
      %s71 = ssub.s32 256, 256
      %72 = vsyncadd [#allocation9], %s71
      %s74 = sshll.u32 [#allocation10], 4
      %s75 = int_to_ptr.vmem [resolvable:$true] %s74
      %77 = dma.hbm_to_vmem [thread:$0]  %s5, 256, %s75, [#allocation9]
    $region25: #{trans_backbone.1} parent=1 // pred_fallthru
      _
    // Predicated region
    $region26: #{trans_backbone.1} parent=1 // pred_check
      _
    $region27: #{trans_backbone.1} parent=1 // pred_check_branch
      %79 = sbr.rel (0) target = $region29
    $region28: #{trans_backbone.1} parent=1 // pred_region
      %s81 = ssub.s32 4096, 4096
      %82 = vsyncadd [#allocation12], %s81
      %s83 = sshll.u32 [#allocation11], 4
      %s84 = int_to_ptr.vmem [resolvable:$true] %s83
      %89 = dma.hbm_to_vmem [thread:$0]  %s6, 4096, %s84, [#allocation12], 1024, 1024, 64
    $region29: #{trans_backbone.1} parent=1 // pred_fallthru
      _
    // Predicated region
    $region30: #{trans_backbone.1} parent=1 // pred_check
      _
    $region31: #{trans_backbone.1} parent=1 // pred_check_branch
      %91 = sbr.rel (0) target = $region33
    $region32: #{trans_backbone.1} parent=1 // pred_region
      %s93 = ssub.s32 256, 256
      %94 = vsyncadd [#allocation12], %s93
      %s95 = sshll.u32 [#allocation13], 4
      %s96 = int_to_ptr.vmem [resolvable:$true] %s95
      %101 = dma.hbm_to_vmem [thread:$0]  %s7, 256, %s96, [#allocation12], 128, 128, 8
    $region33: #{trans_backbone.1} parent=1 // pred_fallthru
      _
    // Predicated region
    $region34: #{trans_backbone.1} parent=1 // pred_check
      _
    $region35: #{trans_backbone.1} parent=1 // pred_check_branch
      %103 = sbr.rel (0) target = $region37
    $region36: #{trans_backbone.1} parent=1 // pred_region
      %104 = dma.done [#allocation3], 256
    $region37: #{trans_backbone.1} parent=1 // pred_fallthru
      _
    // Predicated region
    $region38: #{trans_backbone.1} parent=1 // pred_check
      _
    $region39: #{trans_backbone.1} parent=1 // pred_check_branch
      %106 = sbr.rel (0) target = $region41
    $region40: #{trans_backbone.1} parent=1 // pred_region
      %107 = dma.done [#allocation6], 256
    $region41: #{trans_backbone.1} parent=1 // pred_fallthru
      _
    // Predicated region
    $region42: #{trans_backbone.1} parent=1 // pred_check
      _
    $region43: #{trans_backbone.1} parent=1 // pred_check_branch
      %109 = sbr.rel (0) target = $region45
    $region44: #{trans_backbone.1} parent=1 // pred_region
      %110 = dma.done [#allocation6], 256
    $region45: #{trans_backbone.1} parent=1 // pred_fallthru
      _
    // Predicated region
    $region46: #{trans_backbone.1} parent=1 // pred_check
      _
    $region47: #{trans_backbone.1} parent=1 // pred_check_branch
      %112 = sbr.rel (0) target = $region49
    $region48: #{trans_backbone.1} parent=1 // pred_region
      %113 = dma.done [#allocation9], 4096
    $region49: #{trans_backbone.1} parent=1 // pred_fallthru
      _
    // Predicated region
    $region50: #{trans_backbone.1} parent=1 // pred_check
      _
    $region51: #{trans_backbone.1} parent=1 // pred_check_branch
      %115 = sbr.rel (0) target = $region53
    $region52: #{trans_backbone.1} parent=1 // pred_region
      %116 = dma.done [#allocation9], 256
    $region53: #{trans_backbone.1} parent=1 // pred_fallthru
      _
    // Predicated region
    $region54: #{trans_backbone.1} parent=1 // pred_check
      _
    $region55: #{trans_backbone.1} parent=1 // pred_check_branch
      %118 = sbr.rel (0) target = $region57
    $region56: #{trans_backbone.1} parent=1 // pred_region
      %119 = dma.done [#allocation12], 4096
    $region57: #{trans_backbone.1} parent=1 // pred_fallthru
      _
    // Predicated region
    $region58: #{trans_backbone.1} parent=1 // pred_check
      _
    $region59: #{trans_backbone.1} parent=1 // pred_check_branch
      %121 = sbr.rel (0) target = $region61
    $region60: #{trans_backbone.1} parent=1 // pred_region
      %122 = dma.done [#allocation12], 256
    $region61: #{trans_backbone.1} parent=1 // pred_fallthru
      _
    %v124 = vld [vmem:[#allocation2] sm:$0xff]
    %v125 = vld [vmem:[#allocation2 + $0x8] sm:$0xff]
    %v126 = vld [vmem:[#allocation13] sm:$0xff]
    %v127 = vld [vmem:[#allocation13 + $0x8] sm:$0x3]
    %v128 = vld [vmem:[%s1] sm:$0xf]
    %v129 = vld [vmem:[%s1 + $0x4] sm:$0xf]
    %v130 = vld [vmem:[%s1 + $0x8] sm:$0xf]
    %v131 = vld [vmem:[%s1 + $0xc] sm:$0xf]
    %v132 = vpack.c.bf16 %v125, %v124
    %v133 = vlaneseq
    %v134 = vshrl.u32 %v133, 7
    %v135 = vsub.s32 0, %v134
    %v136 = vrot.slane %v126, %v135
    %v141 = vunpack.c.l.b16 %v128
    %v142 = vunpack.c.l.b16 %v129
    %v143 = vunpack.c.l.b16 %v130
    %v144 = vunpack.c.l.b16 %v131
    %v145 = vpack.c.b16 %v142, %v141
    %v146 = vpack.c.b16 %v144, %v143
    %vm149 = vcmask 261120
    %v151 = vsel %vm149, %v132, 0
    %153 = vmatprep.subr.bf16.mxu0 0
    %154 = vmatpush1.bf16.msra.mxu0 %v145
    %155 = vmatprep.subr.bf16.mxu0 0
    %156 = vmatpush1.bf16.msra.mxu0 %v146
    %157 = vmatprep.subr.bf16.mxu0 0
    %158 = vmatpush1.bf16.msra.mxu0 0
    %159 = vmatprep.subr.bf16.mxu0 0
    %160 = vmatpush1.bf16.msra.mxu0 0
    %161 = vmatprep.subr.bf16.mxu0 0
    %162 = vmatpush1.bf16.msra.mxu0 0
    %163 = vmatprep.subr.bf16.mxu0 0
    %164 = vmatpush1.bf16.msra.mxu0 0
    %165 = vmatprep.subr.bf16.mxu0 0
    %166 = vmatpush1.bf16.msra.mxu0 0
    %167 = vmatprep.subr.bf16.mxu0 0
    %168 = vmatpush1.bf16.msra.mxu0 0
    %169 = vmatprep.subr.bf16.mxu0 0
    %170 = vmatpush1.bf16.msra.mxu0 0
    %171 = vmatprep.subr.bf16.mxu0 0
    %172 = vmatpush1.bf16.msra.mxu0 0
    %173 = vmatprep.subr.bf16.mxu0 0
    %174 = vmatpush1.bf16.msra.mxu0 0
    %175 = vmatprep.subr.bf16.mxu0 0
    %176 = vmatpush1.bf16.msra.mxu0 0
    %177 = vmatprep.subr.bf16.mxu0 0
    %178 = vmatpush1.bf16.msra.mxu0 0
    %179 = vmatprep.subr.bf16.mxu0 0
    %180 = vmatpush1.bf16.msra.mxu0 0
    %181 = vmatprep.subr.bf16.mxu0 0
    %182 = vmatpush1.bf16.msra.mxu0 0
    %183 = vmatprep.subr.bf16.mxu0 0
    %184 = vmatpush1.bf16.msra.mxu0 0
    %185 = vmatprep.mubr.bf16.mxu0 0
    %186 = vmatmul.mubr.bf16.gmra.mrb[0].mxu0 %v151
    %v187 = vpop.f32.mrb[0].mxu0
    %v188 = vadd.f32 %v136, %v187
    %v189 = vpop.f32.mrb[0].mxu0
    %v190 = vpop.f32.mrb[0].mxu0
    %v191 = vadd.f32 %v136, %v190
    %v192 = vpop.f32.mrb[0].mxu0
    %193 = vdwg.mxu0
    %v194 = vld [vmem:[#allocation5] sm:$0xf]
    %v195 = vld [vmem:[#allocation5 + $0x4] sm:$0xf]
    %v196 = vld [vmem:[#allocation5 + $0x8] sm:$0xf]
    %v197 = vld [vmem:[#allocation5 + $0xc] sm:$0xf]
    %v198 = vpack.c.bf16 %v191, %v188
    %v203 = vunpack.c.l.b16 %v194
    %v204 = vunpack.c.l.b16 %v195
    %v205 = vunpack.c.l.b16 %v196
    %v206 = vunpack.c.l.b16 %v197
    %v207 = vpack.c.b16 %v204, %v203
    %v208 = vpack.c.b16 %v206, %v205
    %v212 = vsel %vm149, %v198, 0
    %214 = vmatprep.subr.bf16.mxu0 0
    %215 = vmatpush1.bf16.msra.mxu0 %v207
    %216 = vmatprep.subr.bf16.mxu0 0
    %217 = vmatpush1.bf16.msra.mxu0 %v208
    %218 = vmatprep.subr.bf16.mxu0 0
    %219 = vmatpush1.bf16.msra.mxu0 0
    %220 = vmatprep.subr.bf16.mxu0 0
    %221 = vmatpush1.bf16.msra.mxu0 0
    %222 = vmatprep.subr.bf16.mxu0 0
    %223 = vmatpush1.bf16.msra.mxu0 0
    %224 = vmatprep.subr.bf16.mxu0 0
    %225 = vmatpush1.bf16.msra.mxu0 0
    %226 = vmatprep.subr.bf16.mxu0 0
    %227 = vmatpush1.bf16.msra.mxu0 0
    %228 = vmatprep.subr.bf16.mxu0 0
    %229 = vmatpush1.bf16.msra.mxu0 0
    %230 = vmatprep.subr.bf16.mxu0 0
    %231 = vmatpush1.bf16.msra.mxu0 0
    %232 = vmatprep.subr.bf16.mxu0 0
    %233 = vmatpush1.bf16.msra.mxu0 0
    %234 = vmatprep.subr.bf16.mxu0 0
    %235 = vmatpush1.bf16.msra.mxu0 0
    %236 = vmatprep.subr.bf16.mxu0 0
    %237 = vmatpush1.bf16.msra.mxu0 0
    %238 = vmatprep.subr.bf16.mxu0 0
    %239 = vmatpush1.bf16.msra.mxu0 0
    %240 = vmatprep.subr.bf16.mxu0 0
    %241 = vmatpush1.bf16.msra.mxu0 0
    %242 = vmatprep.subr.bf16.mxu0 0
    %243 = vmatpush1.bf16.msra.mxu0 0
    %244 = vmatprep.subr.bf16.mxu0 0
    %245 = vmatpush1.bf16.msra.mxu0 0
    %246 = vmatprep.mubr.bf16.mxu0 0
    %247 = vmatmul.mubr.bf16.gmra.mrb[0].mxu0 %v212
    %v248 = vpop.f32.mrb[0].mxu0
    %v249 = vadd.f32 0.0, %v248
    %v250 = vpop.f32.mrb[0].mxu0
    %v251 = vpop.f32.mrb[0].mxu0
    %v252 = vadd.f32 0.0, %v251
    %v253 = vpop.f32.mrb[0].mxu0
    %254 = vdwg.mxu0
    %v255 = vlaneseq
    %v256 = vshrl.u32 %v255, 7
    %v257 = vsub.s32 1, %v256
    %v258 = vrot.slane %v126, %v257
    %v259 = vadd.f32 %v249, %v258
    %v260 = vadd.f32 %v252, %v258
    %v261 = vmul.f32 %v259, 0.35355338
    %v262 = vmul.f32 %v260, 0.35355338
    %v263 = vlaneseq
    %v264 = vshrl.u32 %v263, 7
    %v265 = vsub.s32 2, %v264
    %v266 = vrot.slane %v126, %v265
    %268 = vrot.lane.b32.xlu0 %v266, 32
    %v269 = vpop.permute.xlu0 %268
    %v271 = vadd.f32 %v249, %v269
    %v272 = vadd.f32 %v252, %v269
    %v273 = vlaneseq
    %v274 = vshrl.u32 %v273, 7
    %v275 = vsub.s32 3, %v274
    %v276 = vrot.slane %v126, %v275
    %278 = vrot.lane.b32.xlu0 %v276, 64
    %v279 = vpop.permute.xlu0 %278
    %v281 = vadd.f32 %v249, %v279
    %v282 = vadd.f32 %v252, %v279
    %v283 = vlaneseq
    %v284 = vshrl.u32 %v283, 7
    %v285 = vadd.s32 %v284, 8
    %v286 = vlaneseq
    %v287 = vand.u32 %v286, 127
    %v288 = vand.u32 %v284, 4294967288
    %v289 = vand.u32 %v285, 4294967288
    %v290 = vand.u32 %v287, 4294967288
    %vm291 = vcmp.eq.s32.totalorder %v288, %v290
    %vm292 = vcmp.eq.s32.totalorder %v289, %v290
    %295 = vrot.lane.b32.xlu0 %v271, 96
    %v296 = vpop.permute.xlu0 %295
    %297 = vrot.lane.b32.xlu0 %v272, 96
    %v298 = vpop.permute.xlu0 %297
    %vm299 = vcmask 64512
    %v301 = vsel %vm299, %v261, 0
    %v304 = vsel %vm299, %v262, 0
    %v306 = vsel %vm299, %v296, 0
    %v308 = vsel %vm299, %v298, 0
    %310 = vmatprep.subr.mxu0 0.0
    %311 = vmatpush1.xpose.msra.mxu0 %v306
    %312 = vmatprep.subr.mxu0 0.0
    %313 = vmatpush1.xpose.msra.mxu0 %v308
    %314 = vmatprep.subr.mxu0 0.0
    %315 = vmatpush1.xpose.msra.mxu0 0.0
    %316 = vmatprep.subr.mxu0 0.0
    %317 = vmatpush1.xpose.msra.mxu0 0.0
    %318 = vmatprep.subr.mxu0 0.0
    %319 = vmatpush1.xpose.msra.mxu0 0.0
    %320 = vmatprep.subr.mxu0 0.0
    %321 = vmatpush1.xpose.msra.mxu0 0.0
    %322 = vmatprep.subr.mxu0 0.0
    %323 = vmatpush1.xpose.msra.mxu0 0.0
    %324 = vmatprep.subr.mxu0 0.0
    %325 = vmatpush1.xpose.msra.mxu0 0.0
    %326 = vmatprep.subr.mxu0 0.0
    %327 = vmatpush1.xpose.msra.mxu0 0.0
    %328 = vmatprep.subr.mxu0 0.0
    %329 = vmatpush1.xpose.msra.mxu0 0.0
    %330 = vmatprep.subr.mxu0 0.0
    %331 = vmatpush1.xpose.msra.mxu0 0.0
    %332 = vmatprep.subr.mxu0 0.0
    %333 = vmatpush1.xpose.msra.mxu0 0.0
    %334 = vmatprep.subr.mxu0 0.0
    %335 = vmatpush1.xpose.msra.mxu0 0.0
    %336 = vmatprep.subr.mxu0 0.0
    %337 = vmatpush1.xpose.msra.mxu0 0.0
    %338 = vmatprep.subr.mxu0 0.0
    %339 = vmatpush1.xpose.msra.mxu0 0.0
    %340 = vmatprep.subr.mxu0 0.0
    %341 = vmatpush1.xpose.msra.mxu0 0.0
    %342 = vmatprep.subr.mxu0 0.0
    %343 = vmatpush1.xpose.msra.mxu0 0.0
    %344 = vmatprep.subr.mxu0 0.0
    %345 = vmatpush1.xpose.msra.mxu0 0.0
    %346 = vmatprep.subr.mxu0 0.0
    %347 = vmatpush1.xpose.msra.mxu0 0.0
    %348 = vmatprep.subr.mxu0 0.0
    %349 = vmatpush1.xpose.msra.mxu0 0.0
    %350 = vmatprep.subr.mxu0 0.0
    %351 = vmatpush1.xpose.msra.mxu0 0.0
    %352 = vmatprep.subr.mxu0 0.0
    %353 = vmatpush1.xpose.msra.mxu0 0.0
    %354 = vmatprep.subr.mxu0 0.0
    %355 = vmatpush1.xpose.msra.mxu0 0.0
    %356 = vmatprep.subr.mxu0 0.0
    %357 = vmatpush1.xpose.msra.mxu0 0.0
    %358 = vmatprep.subr.mxu0 0.0
    %359 = vmatpush1.xpose.msra.mxu0 0.0
    %360 = vmatprep.subr.mxu0 0.0
    %361 = vmatpush1.xpose.msra.mxu0 0.0
    %362 = vmatprep.subr.mxu0 0.0
    %363 = vmatpush1.xpose.msra.mxu0 0.0
    %364 = vmatprep.subr.mxu0 0.0
    %365 = vmatpush1.xpose.msra.mxu0 0.0
    %366 = vmatprep.subr.mxu0 0.0
    %367 = vmatpush1.xpose.msra.mxu0 0.0
    %368 = vmatprep.subr.mxu0 0.0
    %369 = vmatpush1.xpose.msra.mxu0 0.0
    %370 = vmatprep.subr.mxu0 0.0
    %371 = vmatpush1.xpose.msra.mxu0 0.0
    %372 = vmatprep.subr.mxu0 0.0
    %373 = vmatpush1.xpose.msra.mxu0 0.0
    %374 = vmatprep.mubr.f32.mxu0 0.0
    %375 = vmatmul.mubr.f32.gmra.mrb[0].mxu0 %v301
    %v376 = vpop.f32.mrb[0].mxu0
    %v377 = vadd.f32 0.0, %v376
    %v378 = vpop.f32.mrb[0].mxu0
    %379 = vmatprep.mubr.f32.mxu0 0.0
    %380 = vmatmul.mubr.f32.gmra.mrb[0].mxu0 %v304
    %v381 = vpop.f32.mrb[0].mxu0
    %v382 = vadd.f32 0.0, %v381
    %v383 = vpop.f32.mrb[0].mxu0
    %384 = vdwg.mxu0
    %v385 = vsel %vm291, %v377, -1e+30
    %v386 = vsel %vm292, %v382, -1e+30
    %vm387 = vcmask 130048
    %v388 = vsel %vm387, %v385, -inf
    %389 = vmax.xlane.f32.xlu0 %v388
    %v390 = vpop.xlane.xlu0 %389
    %v391 = vsel %vm387, %v386, -inf
    %392 = vmax.xlane.f32.xlu0 %v391
    %v393 = vpop.xlane.xlu0 %392
    %v394 = vsub.f32 %v385, %v390
    %v395 = vsub.f32 %v386, %v393
    %v396 = vmul.f32 %v394, 1.442695
    %v397 = vpow.pop %v396
    %v398 = vmul.f32 %v395, 1.442695
    %v399 = vpow.pop %v398
    %v400 = vsel %vm387, %v397, 0.0
    %401 = vadd.xlane.f32.xlu0 %v400
    %v402 = vpop.xlane.xlu0 %401
    %v403 = vsel %vm387, %v399, 0.0
    %404 = vadd.xlane.f32.xlu0 %v403
    %v405 = vpop.xlane.xlu0 %404
    %v406 = vrcp.pop %v402
    %v407 = vrcp.pop %v405
    %v408 = vmul.f32 %v397, %v406
    %v409 = vmul.f32 %v399, %v407
    %412 = vrot.lane.b32.xlu0 %v281, 64
    %v413 = vpop.permute.xlu0 %412
    %414 = vrot.lane.b32.xlu0 %v282, 64
    %v415 = vpop.permute.xlu0 %414
    %v419 = vsel %vm387, %v408, 0
    %v422 = vsel %vm387, %v409, 0
    %424 = vmatprep.subr.mxu0 0.0
    %425 = vmatpush1.msra.mxu0 %v413
    %426 = vmatprep.subr.mxu0 0.0
    %427 = vmatpush1.msra.mxu0 %v415
    %428 = vmatprep.subr.mxu0 0.0
    %429 = vmatpush1.msra.mxu0 0.0
    %430 = vmatprep.subr.mxu0 0.0
    %431 = vmatpush1.msra.mxu0 0.0
    %432 = vmatprep.subr.mxu0 0.0
    %433 = vmatpush1.msra.mxu0 0.0
    %434 = vmatprep.subr.mxu0 0.0
    %435 = vmatpush1.msra.mxu0 0.0
    %436 = vmatprep.subr.mxu0 0.0
    %437 = vmatpush1.msra.mxu0 0.0
    %438 = vmatprep.subr.mxu0 0.0
    %439 = vmatpush1.msra.mxu0 0.0
    %440 = vmatprep.subr.mxu0 0.0
    %441 = vmatpush1.msra.mxu0 0.0
    %442 = vmatprep.subr.mxu0 0.0
    %443 = vmatpush1.msra.mxu0 0.0
    %444 = vmatprep.subr.mxu0 0.0
    %445 = vmatpush1.msra.mxu0 0.0
    %446 = vmatprep.subr.mxu0 0.0
    %447 = vmatpush1.msra.mxu0 0.0
    %448 = vmatprep.subr.mxu0 0.0
    %449 = vmatpush1.msra.mxu0 0.0
    %450 = vmatprep.subr.mxu0 0.0
    %451 = vmatpush1.msra.mxu0 0.0
    %452 = vmatprep.subr.mxu0 0.0
    %453 = vmatpush1.msra.mxu0 0.0
    %454 = vmatprep.subr.mxu0 0.0
    %455 = vmatpush1.msra.mxu0 0.0
    %456 = vmatprep.subr.mxu0 0.0
    %457 = vmatpush1.msra.mxu0 0.0
    %458 = vmatprep.subr.mxu0 0.0
    %459 = vmatpush1.msra.mxu0 0.0
    %460 = vmatprep.subr.mxu0 0.0
    %461 = vmatpush1.msra.mxu0 0.0
    %462 = vmatprep.subr.mxu0 0.0
    %463 = vmatpush1.msra.mxu0 0.0
    %464 = vmatprep.subr.mxu0 0.0
    %465 = vmatpush1.msra.mxu0 0.0
    %466 = vmatprep.subr.mxu0 0.0
    %467 = vmatpush1.msra.mxu0 0.0
    %468 = vmatprep.subr.mxu0 0.0
    %469 = vmatpush1.msra.mxu0 0.0
    %470 = vmatprep.subr.mxu0 0.0
    %471 = vmatpush1.msra.mxu0 0.0
    %472 = vmatprep.subr.mxu0 0.0
    %473 = vmatpush1.msra.mxu0 0.0
    %474 = vmatprep.subr.mxu0 0.0
    %475 = vmatpush1.msra.mxu0 0.0
    %476 = vmatprep.subr.mxu0 0.0
    %477 = vmatpush1.msra.mxu0 0.0
    %478 = vmatprep.subr.mxu0 0.0
    %479 = vmatpush1.msra.mxu0 0.0
    %480 = vmatprep.subr.mxu0 0.0
    %481 = vmatpush1.msra.mxu0 0.0
    %482 = vmatprep.subr.mxu0 0.0
    %483 = vmatpush1.msra.mxu0 0.0
    %484 = vmatprep.subr.mxu0 0.0
    %485 = vmatpush1.msra.mxu0 0.0
    %486 = vmatprep.subr.mxu0 0.0
    %487 = vmatpush1.msra.mxu0 0.0
    %488 = vmatprep.mubr.f32.mxu0 0.0
    %489 = vmatmul.mubr.f32.gmra.mrb[0].mxu0 %v419
    %v490 = vpop.f32.mrb[0].mxu0
    %v491 = vadd.f32 0.0, %v490
    %v492 = vpop.f32.mrb[0].mxu0
    %493 = vmatprep.mubr.f32.mxu0 0.0
    %494 = vmatmul.mubr.f32.gmra.mrb[0].mxu0 %v422
    %v495 = vpop.f32.mrb[0].mxu0
    %v496 = vadd.f32 0.0, %v495
    %v497 = vpop.f32.mrb[0].mxu0
    %498 = vdwg.mxu0
    %499 = vrot.lane.b32.xlu0 %v261, 120
    %v500 = vpop.permute.xlu0 %499
    %501 = vrot.lane.b32.xlu0 %v262, 120
    %v502 = vpop.permute.xlu0 %501
    %503 = vrot.lane.b32.xlu0 %v271, 88
    %v504 = vpop.permute.xlu0 %503
    %505 = vrot.lane.b32.xlu0 %v272, 88
    %v506 = vpop.permute.xlu0 %505
    %v507 = vsel %vm299, %v500, 0
    %v509 = vsel %vm299, %v502, 0
    %v511 = vsel %vm299, %v504, 0
    %v513 = vsel %vm299, %v506, 0
    %515 = vmatprep.subr.mxu0 0.0
    %516 = vmatpush1.xpose.msra.mxu0 %v511
    %517 = vmatprep.subr.mxu0 0.0
    %518 = vmatpush1.xpose.msra.mxu0 %v513
    %519 = vmatprep.subr.mxu0 0.0
    %520 = vmatpush1.xpose.msra.mxu0 0.0
    %521 = vmatprep.subr.mxu0 0.0
    %522 = vmatpush1.xpose.msra.mxu0 0.0
    %523 = vmatprep.subr.mxu0 0.0
    %524 = vmatpush1.xpose.msra.mxu0 0.0
    %525 = vmatprep.subr.mxu0 0.0
    %526 = vmatpush1.xpose.msra.mxu0 0.0
    %527 = vmatprep.subr.mxu0 0.0
    %528 = vmatpush1.xpose.msra.mxu0 0.0
    %529 = vmatprep.subr.mxu0 0.0
    %530 = vmatpush1.xpose.msra.mxu0 0.0
    %531 = vmatprep.subr.mxu0 0.0
    %532 = vmatpush1.xpose.msra.mxu0 0.0
    %533 = vmatprep.subr.mxu0 0.0
    %534 = vmatpush1.xpose.msra.mxu0 0.0
    %535 = vmatprep.subr.mxu0 0.0
    %536 = vmatpush1.xpose.msra.mxu0 0.0
    %537 = vmatprep.subr.mxu0 0.0
    %538 = vmatpush1.xpose.msra.mxu0 0.0
    %539 = vmatprep.subr.mxu0 0.0
    %540 = vmatpush1.xpose.msra.mxu0 0.0
    %541 = vmatprep.subr.mxu0 0.0
    %542 = vmatpush1.xpose.msra.mxu0 0.0
    %543 = vmatprep.subr.mxu0 0.0
    %544 = vmatpush1.xpose.msra.mxu0 0.0
    %545 = vmatprep.subr.mxu0 0.0
    %546 = vmatpush1.xpose.msra.mxu0 0.0
    %547 = vmatprep.subr.mxu0 0.0
    %548 = vmatpush1.xpose.msra.mxu0 0.0
    %549 = vmatprep.subr.mxu0 0.0
    %550 = vmatpush1.xpose.msra.mxu0 0.0
    %551 = vmatprep.subr.mxu0 0.0
    %552 = vmatpush1.xpose.msra.mxu0 0.0
    %553 = vmatprep.subr.mxu0 0.0
    %554 = vmatpush1.xpose.msra.mxu0 0.0
    %555 = vmatprep.subr.mxu0 0.0
    %556 = vmatpush1.xpose.msra.mxu0 0.0
    %557 = vmatprep.subr.mxu0 0.0
    %558 = vmatpush1.xpose.msra.mxu0 0.0
    %559 = vmatprep.subr.mxu0 0.0
    %560 = vmatpush1.xpose.msra.mxu0 0.0
    %561 = vmatprep.subr.mxu0 0.0
    %562 = vmatpush1.xpose.msra.mxu0 0.0
    %563 = vmatprep.subr.mxu0 0.0
    %564 = vmatpush1.xpose.msra.mxu0 0.0
    %565 = vmatprep.subr.mxu0 0.0
    %566 = vmatpush1.xpose.msra.mxu0 0.0
    %567 = vmatprep.subr.mxu0 0.0
    %568 = vmatpush1.xpose.msra.mxu0 0.0
    %569 = vmatprep.subr.mxu0 0.0
    %570 = vmatpush1.xpose.msra.mxu0 0.0
    %571 = vmatprep.subr.mxu0 0.0
    %572 = vmatpush1.xpose.msra.mxu0 0.0
    %573 = vmatprep.subr.mxu0 0.0
    %574 = vmatpush1.xpose.msra.mxu0 0.0
    %575 = vmatprep.subr.mxu0 0.0
    %576 = vmatpush1.xpose.msra.mxu0 0.0
    %577 = vmatprep.subr.mxu0 0.0
    %578 = vmatpush1.xpose.msra.mxu0 0.0
    %579 = vmatprep.mubr.f32.mxu0 0.0
    %580 = vmatmul.mubr.f32.gmra.mrb[0].mxu0 %v507
    %v581 = vpop.f32.mrb[0].mxu0
    %v582 = vadd.f32 0.0, %v581
    %v583 = vpop.f32.mrb[0].mxu0
    %584 = vmatprep.mubr.f32.mxu0 0.0
    %585 = vmatmul.mubr.f32.gmra.mrb[0].mxu0 %v509
    %v586 = vpop.f32.mrb[0].mxu0
    %v587 = vadd.f32 0.0, %v586
    %v588 = vpop.f32.mrb[0].mxu0
    %589 = vdwg.mxu0
    %v590 = vsel %vm291, %v582, -1e+30
    %v591 = vsel %vm292, %v587, -1e+30
    %v592 = vsel %vm387, %v590, -inf
    %593 = vmax.xlane.f32.xlu0 %v592
    %v594 = vpop.xlane.xlu0 %593
    %v595 = vsel %vm387, %v591, -inf
    %596 = vmax.xlane.f32.xlu0 %v595
    %v597 = vpop.xlane.xlu0 %596
    %v598 = vsub.f32 %v590, %v594
    %v599 = vsub.f32 %v591, %v597
    %v600 = vmul.f32 %v598, 1.442695
    %v601 = vpow.pop %v600
    %v602 = vmul.f32 %v599, 1.442695
    %v603 = vpow.pop %v602
    %v604 = vsel %vm387, %v601, 0.0
    %605 = vadd.xlane.f32.xlu0 %v604
    %v606 = vpop.xlane.xlu0 %605
    %v607 = vsel %vm387, %v603, 0.0
    %608 = vadd.xlane.f32.xlu0 %v607
    %v609 = vpop.xlane.xlu0 %608
    %v610 = vrcp.pop %v606
    %v611 = vrcp.pop %v609
    %v612 = vmul.f32 %v601, %v610
    %v613 = vmul.f32 %v603, %v611
    %614 = vrot.lane.b32.xlu0 %v281, 56
    %v615 = vpop.permute.xlu0 %614
    %616 = vrot.lane.b32.xlu0 %v282, 56
    %v617 = vpop.permute.xlu0 %616
    %v621 = vsel %vm387, %v612, 0
    %v624 = vsel %vm387, %v613, 0
    %626 = vmatprep.subr.mxu0 0.0
    %627 = vmatpush1.msra.mxu0 %v615
    %628 = vmatprep.subr.mxu0 0.0
    %629 = vmatpush1.msra.mxu0 %v617
    %630 = vmatprep.subr.mxu0 0.0
    %631 = vmatpush1.msra.mxu0 0.0
    %632 = vmatprep.subr.mxu0 0.0
    %633 = vmatpush1.msra.mxu0 0.0
    %634 = vmatprep.subr.mxu0 0.0
    %635 = vmatpush1.msra.mxu0 0.0
    %636 = vmatprep.subr.mxu0 0.0
    %637 = vmatpush1.msra.mxu0 0.0
    %638 = vmatprep.subr.mxu0 0.0
    %639 = vmatpush1.msra.mxu0 0.0
    %640 = vmatprep.subr.mxu0 0.0
    %641 = vmatpush1.msra.mxu0 0.0
    %642 = vmatprep.subr.mxu0 0.0
    %643 = vmatpush1.msra.mxu0 0.0
    %644 = vmatprep.subr.mxu0 0.0
    %645 = vmatpush1.msra.mxu0 0.0
    %646 = vmatprep.subr.mxu0 0.0
    %647 = vmatpush1.msra.mxu0 0.0
    %648 = vmatprep.subr.mxu0 0.0
    %649 = vmatpush1.msra.mxu0 0.0
    %650 = vmatprep.subr.mxu0 0.0
    %651 = vmatpush1.msra.mxu0 0.0
    %652 = vmatprep.subr.mxu0 0.0
    %653 = vmatpush1.msra.mxu0 0.0
    %654 = vmatprep.subr.mxu0 0.0
    %655 = vmatpush1.msra.mxu0 0.0
    %656 = vmatprep.subr.mxu0 0.0
    %657 = vmatpush1.msra.mxu0 0.0
    %658 = vmatprep.subr.mxu0 0.0
    %659 = vmatpush1.msra.mxu0 0.0
    %660 = vmatprep.subr.mxu0 0.0
    %661 = vmatpush1.msra.mxu0 0.0
    %662 = vmatprep.subr.mxu0 0.0
    %663 = vmatpush1.msra.mxu0 0.0
    %664 = vmatprep.subr.mxu0 0.0
    %665 = vmatpush1.msra.mxu0 0.0
    %666 = vmatprep.subr.mxu0 0.0
    %667 = vmatpush1.msra.mxu0 0.0
    %668 = vmatprep.subr.mxu0 0.0
    %669 = vmatpush1.msra.mxu0 0.0
    %670 = vmatprep.subr.mxu0 0.0
    %671 = vmatpush1.msra.mxu0 0.0
    %672 = vmatprep.subr.mxu0 0.0
    %673 = vmatpush1.msra.mxu0 0.0
    %674 = vmatprep.subr.mxu0 0.0
    %675 = vmatpush1.msra.mxu0 0.0
    %676 = vmatprep.subr.mxu0 0.0
    %677 = vmatpush1.msra.mxu0 0.0
    %678 = vmatprep.subr.mxu0 0.0
    %679 = vmatpush1.msra.mxu0 0.0
    %680 = vmatprep.subr.mxu0 0.0
    %681 = vmatpush1.msra.mxu0 0.0
    %682 = vmatprep.subr.mxu0 0.0
    %683 = vmatpush1.msra.mxu0 0.0
    %684 = vmatprep.subr.mxu0 0.0
    %685 = vmatpush1.msra.mxu0 0.0
    %686 = vmatprep.subr.mxu0 0.0
    %687 = vmatpush1.msra.mxu0 0.0
    %688 = vmatprep.subr.mxu0 0.0
    %689 = vmatpush1.msra.mxu0 0.0
    %690 = vmatprep.mubr.f32.mxu0 0.0
    %691 = vmatmul.mubr.f32.gmra.mrb[0].mxu0 %v621
    %v692 = vpop.f32.mrb[0].mxu0
    %v693 = vadd.f32 0.0, %v692
    %v694 = vpop.f32.mrb[0].mxu0
    %695 = vmatprep.mubr.f32.mxu0 0.0
    %696 = vmatmul.mubr.f32.gmra.mrb[0].mxu0 %v624
    %v697 = vpop.f32.mrb[0].mxu0
    %v698 = vadd.f32 0.0, %v697
    %v699 = vpop.f32.mrb[0].mxu0
    %700 = vdwg.mxu0
    %701 = vrot.lane.b32.xlu0 %v261, 112
    %v702 = vpop.permute.xlu0 %701
    %703 = vrot.lane.b32.xlu0 %v262, 112
    %v704 = vpop.permute.xlu0 %703
    %705 = vrot.lane.b32.xlu0 %v271, 80
    %v706 = vpop.permute.xlu0 %705
    %707 = vrot.lane.b32.xlu0 %v272, 80
    %v708 = vpop.permute.xlu0 %707
    %v709 = vsel %vm299, %v702, 0
    %v711 = vsel %vm299, %v704, 0
    %v713 = vsel %vm299, %v706, 0
    %v715 = vsel %vm299, %v708, 0
    %717 = vmatprep.subr.mxu0 0.0
    %718 = vmatpush1.xpose.msra.mxu0 %v713
    %719 = vmatprep.subr.mxu0 0.0
    %720 = vmatpush1.xpose.msra.mxu0 %v715
    %721 = vmatprep.subr.mxu0 0.0
    %722 = vmatpush1.xpose.msra.mxu0 0.0
    %723 = vmatprep.subr.mxu0 0.0
    %724 = vmatpush1.xpose.msra.mxu0 0.0
    %725 = vmatprep.subr.mxu0 0.0
    %726 = vmatpush1.xpose.msra.mxu0 0.0
    %727 = vmatprep.subr.mxu0 0.0
    %728 = vmatpush1.xpose.msra.mxu0 0.0
    %729 = vmatprep.subr.mxu0 0.0
    %730 = vmatpush1.xpose.msra.mxu0 0.0
    %731 = vmatprep.subr.mxu0 0.0
    %732 = vmatpush1.xpose.msra.mxu0 0.0
    %733 = vmatprep.subr.mxu0 0.0
    %734 = vmatpush1.xpose.msra.mxu0 0.0
    %735 = vmatprep.subr.mxu0 0.0
    %736 = vmatpush1.xpose.msra.mxu0 0.0
    %737 = vmatprep.subr.mxu0 0.0
    %738 = vmatpush1.xpose.msra.mxu0 0.0
    %739 = vmatprep.subr.mxu0 0.0
    %740 = vmatpush1.xpose.msra.mxu0 0.0
    %741 = vmatprep.subr.mxu0 0.0
    %742 = vmatpush1.xpose.msra.mxu0 0.0
    %743 = vmatprep.subr.mxu0 0.0
    %744 = vmatpush1.xpose.msra.mxu0 0.0
    %745 = vmatprep.subr.mxu0 0.0
    %746 = vmatpush1.xpose.msra.mxu0 0.0
    %747 = vmatprep.subr.mxu0 0.0
    %748 = vmatpush1.xpose.msra.mxu0 0.0
    %749 = vmatprep.subr.mxu0 0.0
    %750 = vmatpush1.xpose.msra.mxu0 0.0
    %751 = vmatprep.subr.mxu0 0.0
    %752 = vmatpush1.xpose.msra.mxu0 0.0
    %753 = vmatprep.subr.mxu0 0.0
    %754 = vmatpush1.xpose.msra.mxu0 0.0
    %755 = vmatprep.subr.mxu0 0.0
    %756 = vmatpush1.xpose.msra.mxu0 0.0
    %757 = vmatprep.subr.mxu0 0.0
    %758 = vmatpush1.xpose.msra.mxu0 0.0
    %759 = vmatprep.subr.mxu0 0.0
    %760 = vmatpush1.xpose.msra.mxu0 0.0
    %761 = vmatprep.subr.mxu0 0.0
    %762 = vmatpush1.xpose.msra.mxu0 0.0
    %763 = vmatprep.subr.mxu0 0.0
    %764 = vmatpush1.xpose.msra.mxu0 0.0
    %765 = vmatprep.subr.mxu0 0.0
    %766 = vmatpush1.xpose.msra.mxu0 0.0
    %767 = vmatprep.subr.mxu0 0.0
    %768 = vmatpush1.xpose.msra.mxu0 0.0
    %769 = vmatprep.subr.mxu0 0.0
    %770 = vmatpush1.xpose.msra.mxu0 0.0
    %771 = vmatprep.subr.mxu0 0.0
    %772 = vmatpush1.xpose.msra.mxu0 0.0
    %773 = vmatprep.subr.mxu0 0.0
    %774 = vmatpush1.xpose.msra.mxu0 0.0
    %775 = vmatprep.subr.mxu0 0.0
    %776 = vmatpush1.xpose.msra.mxu0 0.0
    %777 = vmatprep.subr.mxu0 0.0
    %778 = vmatpush1.xpose.msra.mxu0 0.0
    %779 = vmatprep.subr.mxu0 0.0
    %780 = vmatpush1.xpose.msra.mxu0 0.0
    %781 = vmatprep.mubr.f32.mxu0 0.0
    %782 = vmatmul.mubr.f32.gmra.mrb[0].mxu0 %v709
    %v783 = vpop.f32.mrb[0].mxu0
    %v784 = vadd.f32 0.0, %v783
    %v785 = vpop.f32.mrb[0].mxu0
    %786 = vmatprep.mubr.f32.mxu0 0.0
    %787 = vmatmul.mubr.f32.gmra.mrb[0].mxu0 %v711
    %v788 = vpop.f32.mrb[0].mxu0
    %v789 = vadd.f32 0.0, %v788
    %v790 = vpop.f32.mrb[0].mxu0
    %791 = vdwg.mxu0
    %v792 = vsel %vm291, %v784, -1e+30
    %v793 = vsel %vm292, %v789, -1e+30
    %v794 = vsel %vm387, %v792, -inf
    %795 = vmax.xlane.f32.xlu0 %v794
    %v796 = vpop.xlane.xlu0 %795
    %v797 = vsel %vm387, %v793, -inf
    %798 = vmax.xlane.f32.xlu0 %v797
    %v799 = vpop.xlane.xlu0 %798
    %v800 = vsub.f32 %v792, %v796
    %v801 = vsub.f32 %v793, %v799
    %v802 = vmul.f32 %v800, 1.442695
    %v803 = vpow.pop %v802
    %v804 = vmul.f32 %v801, 1.442695
    %v805 = vpow.pop %v804
    %v806 = vsel %vm387, %v803, 0.0
    %807 = vadd.xlane.f32.xlu0 %v806
    %v808 = vpop.xlane.xlu0 %807
    %v809 = vsel %vm387, %v805, 0.0
    %810 = vadd.xlane.f32.xlu0 %v809
    %v811 = vpop.xlane.xlu0 %810
    %v812 = vrcp.pop %v808
    %v813 = vrcp.pop %v811
    %v814 = vmul.f32 %v803, %v812
    %v815 = vmul.f32 %v805, %v813
    %816 = vrot.lane.b32.xlu0 %v281, 48
    %v817 = vpop.permute.xlu0 %816
    %818 = vrot.lane.b32.xlu0 %v282, 48
    %v819 = vpop.permute.xlu0 %818
    %v823 = vsel %vm387, %v814, 0
    %v826 = vsel %vm387, %v815, 0
    %828 = vmatprep.subr.mxu0 0.0
    %829 = vmatpush1.msra.mxu0 %v817
    %830 = vmatprep.subr.mxu0 0.0
    %831 = vmatpush1.msra.mxu0 %v819
    %832 = vmatprep.subr.mxu0 0.0
    %833 = vmatpush1.msra.mxu0 0.0
    %834 = vmatprep.subr.mxu0 0.0
    %835 = vmatpush1.msra.mxu0 0.0
    %836 = vmatprep.subr.mxu0 0.0
    %837 = vmatpush1.msra.mxu0 0.0
    %838 = vmatprep.subr.mxu0 0.0
    %839 = vmatpush1.msra.mxu0 0.0
    %840 = vmatprep.subr.mxu0 0.0
    %841 = vmatpush1.msra.mxu0 0.0
    %842 = vmatprep.subr.mxu0 0.0
    %843 = vmatpush1.msra.mxu0 0.0
    %844 = vmatprep.subr.mxu0 0.0
    %845 = vmatpush1.msra.mxu0 0.0
    %846 = vmatprep.subr.mxu0 0.0
    %847 = vmatpush1.msra.mxu0 0.0
    %848 = vmatprep.subr.mxu0 0.0
    %849 = vmatpush1.msra.mxu0 0.0
    %850 = vmatprep.subr.mxu0 0.0
    %851 = vmatpush1.msra.mxu0 0.0
    %852 = vmatprep.subr.mxu0 0.0
    %853 = vmatpush1.msra.mxu0 0.0
    %854 = vmatprep.subr.mxu0 0.0
    %855 = vmatpush1.msra.mxu0 0.0
    %856 = vmatprep.subr.mxu0 0.0
    %857 = vmatpush1.msra.mxu0 0.0
    %858 = vmatprep.subr.mxu0 0.0
    %859 = vmatpush1.msra.mxu0 0.0
    %860 = vmatprep.subr.mxu0 0.0
    %861 = vmatpush1.msra.mxu0 0.0
    %862 = vmatprep.subr.mxu0 0.0
    %863 = vmatpush1.msra.mxu0 0.0
    %864 = vmatprep.subr.mxu0 0.0
    %865 = vmatpush1.msra.mxu0 0.0
    %866 = vmatprep.subr.mxu0 0.0
    %867 = vmatpush1.msra.mxu0 0.0
    %868 = vmatprep.subr.mxu0 0.0
    %869 = vmatpush1.msra.mxu0 0.0
    %870 = vmatprep.subr.mxu0 0.0
    %871 = vmatpush1.msra.mxu0 0.0
    %872 = vmatprep.subr.mxu0 0.0
    %873 = vmatpush1.msra.mxu0 0.0
    %874 = vmatprep.subr.mxu0 0.0
    %875 = vmatpush1.msra.mxu0 0.0
    %876 = vmatprep.subr.mxu0 0.0
    %877 = vmatpush1.msra.mxu0 0.0
    %878 = vmatprep.subr.mxu0 0.0
    %879 = vmatpush1.msra.mxu0 0.0
    %880 = vmatprep.subr.mxu0 0.0
    %881 = vmatpush1.msra.mxu0 0.0
    %882 = vmatprep.subr.mxu0 0.0
    %883 = vmatpush1.msra.mxu0 0.0
    %884 = vmatprep.subr.mxu0 0.0
    %885 = vmatpush1.msra.mxu0 0.0
    %886 = vmatprep.subr.mxu0 0.0
    %887 = vmatpush1.msra.mxu0 0.0
    %888 = vmatprep.subr.mxu0 0.0
    %889 = vmatpush1.msra.mxu0 0.0
    %890 = vmatprep.subr.mxu0 0.0
    %891 = vmatpush1.msra.mxu0 0.0
    %892 = vmatprep.mubr.f32.mxu0 0.0
    %893 = vmatmul.mubr.f32.gmra.mrb[0].mxu0 %v823
    %v894 = vpop.f32.mrb[0].mxu0
    %v895 = vadd.f32 0.0, %v894
    %v896 = vpop.f32.mrb[0].mxu0
    %897 = vmatprep.mubr.f32.mxu0 0.0
    %898 = vmatmul.mubr.f32.gmra.mrb[0].mxu0 %v826
    %v899 = vpop.f32.mrb[0].mxu0
    %v900 = vadd.f32 0.0, %v899
    %v901 = vpop.f32.mrb[0].mxu0
    %902 = vdwg.mxu0
    %903 = vrot.lane.b32.xlu0 %v261, 104
    %v904 = vpop.permute.xlu0 %903
    %905 = vrot.lane.b32.xlu0 %v262, 104
    %v906 = vpop.permute.xlu0 %905
    %907 = vrot.lane.b32.xlu0 %v271, 72
    %v908 = vpop.permute.xlu0 %907
    %909 = vrot.lane.b32.xlu0 %v272, 72
    %v910 = vpop.permute.xlu0 %909
    %v911 = vsel %vm299, %v904, 0
    %v913 = vsel %vm299, %v906, 0
    %v915 = vsel %vm299, %v908, 0
    %v917 = vsel %vm299, %v910, 0
    %919 = vmatprep.subr.mxu0 0.0
    %920 = vmatpush1.xpose.msra.mxu0 %v915
    %921 = vmatprep.subr.mxu0 0.0
    %922 = vmatpush1.xpose.msra.mxu0 %v917
    %923 = vmatprep.subr.mxu0 0.0
    %924 = vmatpush1.xpose.msra.mxu0 0.0
    %925 = vmatprep.subr.mxu0 0.0
    %926 = vmatpush1.xpose.msra.mxu0 0.0
    %927 = vmatprep.subr.mxu0 0.0
    %928 = vmatpush1.xpose.msra.mxu0 0.0
    %929 = vmatprep.subr.mxu0 0.0
    %930 = vmatpush1.xpose.msra.mxu0 0.0
    %931 = vmatprep.subr.mxu0 0.0
    %932 = vmatpush1.xpose.msra.mxu0 0.0
    %933 = vmatprep.subr.mxu0 0.0
    %934 = vmatpush1.xpose.msra.mxu0 0.0
    %935 = vmatprep.subr.mxu0 0.0
    %936 = vmatpush1.xpose.msra.mxu0 0.0
    %937 = vmatprep.subr.mxu0 0.0
    %938 = vmatpush1.xpose.msra.mxu0 0.0
    %939 = vmatprep.subr.mxu0 0.0
    %940 = vmatpush1.xpose.msra.mxu0 0.0
    %941 = vmatprep.subr.mxu0 0.0
    %942 = vmatpush1.xpose.msra.mxu0 0.0
    %943 = vmatprep.subr.mxu0 0.0
    %944 = vmatpush1.xpose.msra.mxu0 0.0
    %945 = vmatprep.subr.mxu0 0.0
    %946 = vmatpush1.xpose.msra.mxu0 0.0
    %947 = vmatprep.subr.mxu0 0.0
    %948 = vmatpush1.xpose.msra.mxu0 0.0
    %949 = vmatprep.subr.mxu0 0.0
    %950 = vmatpush1.xpose.msra.mxu0 0.0
    %951 = vmatprep.subr.mxu0 0.0
    %952 = vmatpush1.xpose.msra.mxu0 0.0
    %953 = vmatprep.subr.mxu0 0.0
    %954 = vmatpush1.xpose.msra.mxu0 0.0
    %955 = vmatprep.subr.mxu0 0.0
    %956 = vmatpush1.xpose.msra.mxu0 0.0
    %957 = vmatprep.subr.mxu0 0.0
    %958 = vmatpush1.xpose.msra.mxu0 0.0
    %959 = vmatprep.subr.mxu0 0.0
    %960 = vmatpush1.xpose.msra.mxu0 0.0
    %961 = vmatprep.subr.mxu0 0.0
    %962 = vmatpush1.xpose.msra.mxu0 0.0
    %963 = vmatprep.subr.mxu0 0.0
    %964 = vmatpush1.xpose.msra.mxu0 0.0
    %965 = vmatprep.subr.mxu0 0.0
    %966 = vmatpush1.xpose.msra.mxu0 0.0
    %967 = vmatprep.subr.mxu0 0.0
    %968 = vmatpush1.xpose.msra.mxu0 0.0
    %969 = vmatprep.subr.mxu0 0.0
    %970 = vmatpush1.xpose.msra.mxu0 0.0
    %971 = vmatprep.subr.mxu0 0.0
    %972 = vmatpush1.xpose.msra.mxu0 0.0
    %973 = vmatprep.subr.mxu0 0.0
    %974 = vmatpush1.xpose.msra.mxu0 0.0
    %975 = vmatprep.subr.mxu0 0.0
    %976 = vmatpush1.xpose.msra.mxu0 0.0
    %977 = vmatprep.subr.mxu0 0.0
    %978 = vmatpush1.xpose.msra.mxu0 0.0
    %979 = vmatprep.subr.mxu0 0.0
    %980 = vmatpush1.xpose.msra.mxu0 0.0
    %981 = vmatprep.subr.mxu0 0.0
    %982 = vmatpush1.xpose.msra.mxu0 0.0
    %983 = vmatprep.mubr.f32.mxu0 0.0
    %984 = vmatmul.mubr.f32.gmra.mrb[0].mxu0 %v911
    %v985 = vpop.f32.mrb[0].mxu0
    %v986 = vadd.f32 0.0, %v985
    %v987 = vpop.f32.mrb[0].mxu0
    %988 = vmatprep.mubr.f32.mxu0 0.0
    %989 = vmatmul.mubr.f32.gmra.mrb[0].mxu0 %v913
    %v990 = vpop.f32.mrb[0].mxu0
    %v991 = vadd.f32 0.0, %v990
    %v992 = vpop.f32.mrb[0].mxu0
    %993 = vdwg.mxu0
    %v994 = vsel %vm291, %v986, -1e+30
    %v995 = vsel %vm292, %v991, -1e+30
    %v996 = vsel %vm387, %v994, -inf
    %997 = vmax.xlane.f32.xlu0 %v996
    %v998 = vpop.xlane.xlu0 %997
    %v999 = vsel %vm387, %v995, -inf
    %1000 = vmax.xlane.f32.xlu0 %v999
    %v1001 = vpop.xlane.xlu0 %1000
    %v1002 = vsub.f32 %v994, %v998
    %v1003 = vsub.f32 %v995, %v1001
    %v1004 = vmul.f32 %v1002, 1.442695
    %v1005 = vpow.pop %v1004
    %v1006 = vmul.f32 %v1003, 1.442695
    %v1007 = vpow.pop %v1006
    %v1008 = vsel %vm387, %v1005, 0.0
    %1009 = vadd.xlane.f32.xlu0 %v1008
    %v1010 = vpop.xlane.xlu0 %1009
    %v1011 = vsel %vm387, %v1007, 0.0
    %1012 = vadd.xlane.f32.xlu0 %v1011
    %v1013 = vpop.xlane.xlu0 %1012
    %v1014 = vrcp.pop %v1010
    %v1015 = vrcp.pop %v1013
    %v1016 = vmul.f32 %v1005, %v1014
    %v1017 = vmul.f32 %v1007, %v1015
    %1018 = vrot.lane.b32.xlu0 %v281, 40
    %v1019 = vpop.permute.xlu0 %1018
    %1020 = vrot.lane.b32.xlu0 %v282, 40
    %v1021 = vpop.permute.xlu0 %1020
    %v1025 = vsel %vm387, %v1016, 0
    %v1028 = vsel %vm387, %v1017, 0
    %1030 = vmatprep.subr.mxu0 0.0
    %1031 = vmatpush1.msra.mxu0 %v1019
    %1032 = vmatprep.subr.mxu0 0.0
    %1033 = vmatpush1.msra.mxu0 %v1021
    %1034 = vmatprep.subr.mxu0 0.0
    %1035 = vmatpush1.msra.mxu0 0.0
    %1036 = vmatprep.subr.mxu0 0.0
    %1037 = vmatpush1.msra.mxu0 0.0
    %1038 = vmatprep.subr.mxu0 0.0
    %1039 = vmatpush1.msra.mxu0 0.0
    %1040 = vmatprep.subr.mxu0 0.0
    %1041 = vmatpush1.msra.mxu0 0.0
    %1042 = vmatprep.subr.mxu0 0.0
    %1043 = vmatpush1.msra.mxu0 0.0
    %1044 = vmatprep.subr.mxu0 0.0
    %1045 = vmatpush1.msra.mxu0 0.0
    %1046 = vmatprep.subr.mxu0 0.0
    %1047 = vmatpush1.msra.mxu0 0.0
    %1048 = vmatprep.subr.mxu0 0.0
    %1049 = vmatpush1.msra.mxu0 0.0
    %1050 = vmatprep.subr.mxu0 0.0
    %1051 = vmatpush1.msra.mxu0 0.0
    %1052 = vmatprep.subr.mxu0 0.0
    %1053 = vmatpush1.msra.mxu0 0.0
    %1054 = vmatprep.subr.mxu0 0.0
    %1055 = vmatpush1.msra.mxu0 0.0
    %1056 = vmatprep.subr.mxu0 0.0
    %1057 = vmatpush1.msra.mxu0 0.0
    %1058 = vmatprep.subr.mxu0 0.0
    %1059 = vmatpush1.msra.mxu0 0.0
    %1060 = vmatprep.subr.mxu0 0.0
    %1061 = vmatpush1.msra.mxu0 0.0
    %1062 = vmatprep.subr.mxu0 0.0
    %1063 = vmatpush1.msra.mxu0 0.0
    %1064 = vmatprep.subr.mxu0 0.0
    %1065 = vmatpush1.msra.mxu0 0.0
    %1066 = vmatprep.subr.mxu0 0.0
    %1067 = vmatpush1.msra.mxu0 0.0
    %1068 = vmatprep.subr.mxu0 0.0
    %1069 = vmatpush1.msra.mxu0 0.0
    %1070 = vmatprep.subr.mxu0 0.0
    %1071 = vmatpush1.msra.mxu0 0.0
    %1072 = vmatprep.subr.mxu0 0.0
    %1073 = vmatpush1.msra.mxu0 0.0
    %1074 = vmatprep.subr.mxu0 0.0
    %1075 = vmatpush1.msra.mxu0 0.0
    %1076 = vmatprep.subr.mxu0 0.0
    %1077 = vmatpush1.msra.mxu0 0.0
    %1078 = vmatprep.subr.mxu0 0.0
    %1079 = vmatpush1.msra.mxu0 0.0
    %1080 = vmatprep.subr.mxu0 0.0
    %1081 = vmatpush1.msra.mxu0 0.0
    %1082 = vmatprep.subr.mxu0 0.0
    %1083 = vmatpush1.msra.mxu0 0.0
    %1084 = vmatprep.subr.mxu0 0.0
    %1085 = vmatpush1.msra.mxu0 0.0
    %1086 = vmatprep.subr.mxu0 0.0
    %1087 = vmatpush1.msra.mxu0 0.0
    %1088 = vmatprep.subr.mxu0 0.0
    %1089 = vmatpush1.msra.mxu0 0.0
    %1090 = vmatprep.subr.mxu0 0.0
    %1091 = vmatpush1.msra.mxu0 0.0
    %1092 = vmatprep.subr.mxu0 0.0
    %1093 = vmatpush1.msra.mxu0 0.0
    %1094 = vmatprep.mubr.f32.mxu0 0.0
    %1095 = vmatmul.mubr.f32.gmra.mrb[0].mxu0 %v1025
    %v1096 = vpop.f32.mrb[0].mxu0
    %v1097 = vadd.f32 0.0, %v1096
    %v1098 = vpop.f32.mrb[0].mxu0
    %1099 = vmatprep.mubr.f32.mxu0 0.0
    %1100 = vmatmul.mubr.f32.gmra.mrb[0].mxu0 %v1028
    %v1101 = vpop.f32.mrb[0].mxu0
    %v1102 = vadd.f32 0.0, %v1101
    %v1103 = vpop.f32.mrb[0].mxu0
    %1104 = vdwg.mxu0
    %1107 = vrot.lane.b32.xlu0 %v693, 8
    %v1108 = vpop.permute.xlu0 %1107
    %1109 = vrot.lane.b32.xlu0 %v698, 8
    %v1110 = vpop.permute.xlu0 %1109
    %1115 = vrot.lane.b32.xlu0 %v895, 16
    %v1116 = vpop.permute.xlu0 %1115
    %1117 = vrot.lane.b32.xlu0 %v900, 16
    %v1118 = vpop.permute.xlu0 %1117
    %1123 = vrot.lane.b32.xlu0 %v1097, 24
    %v1124 = vpop.permute.xlu0 %1123
    %1125 = vrot.lane.b32.xlu0 %v1102, 24
    %v1126 = vpop.permute.xlu0 %1125
    %v1129 = vsel %vm299, %v491, %v1108
    %v1130 = vsel %vm299, %v496, %v1110
    %v1131 = vsel %vm387, %v1129, %v1116
    %v1132 = vsel %vm387, %v1130, %v1118
    %vm1133 = vcmask 195584
    %v1134 = vsel %vm1133, %v1131, %v1124
    %v1135 = vsel %vm1133, %v1132, %v1126
    %v1136 = vld [vmem:[#allocation7] sm:$0xf]
    %v1137 = vld [vmem:[#allocation7 + $0x4] sm:$0xf]
    %v1138 = vld [vmem:[#allocation7 + $0x8] sm:$0xf]
    %v1139 = vld [vmem:[#allocation7 + $0xc] sm:$0xf]
    %v1140 = vpack.c.bf16 %v1135, %v1134
    %v1141 = vlaneseq
    %v1142 = vshrl.u32 %v1141, 7
    %v1143 = vsub.s32 4, %v1142
    %v1144 = vrot.slane %v126, %v1143
    %v1149 = vunpack.c.l.b16 %v1136
    %v1150 = vunpack.c.l.b16 %v1137
    %v1151 = vunpack.c.l.b16 %v1138
    %v1152 = vunpack.c.l.b16 %v1139
    %v1153 = vpack.c.b16 %v1150, %v1149
    %v1154 = vpack.c.b16 %v1152, %v1151
    %v1158 = vsel %vm149, %v1140, 0
    %1160 = vmatprep.subr.bf16.mxu0 0
    %1161 = vmatpush1.bf16.msra.mxu0 %v1153
    %1162 = vmatprep.subr.bf16.mxu0 0
    %1163 = vmatpush1.bf16.msra.mxu0 %v1154
    %1164 = vmatprep.subr.bf16.mxu0 0
    %1165 = vmatpush1.bf16.msra.mxu0 0
    %1166 = vmatprep.subr.bf16.mxu0 0
    %1167 = vmatpush1.bf16.msra.mxu0 0
    %1168 = vmatprep.subr.bf16.mxu0 0
    %1169 = vmatpush1.bf16.msra.mxu0 0
    %1170 = vmatprep.subr.bf16.mxu0 0
    %1171 = vmatpush1.bf16.msra.mxu0 0
    %1172 = vmatprep.subr.bf16.mxu0 0
    %1173 = vmatpush1.bf16.msra.mxu0 0
    %1174 = vmatprep.subr.bf16.mxu0 0
    %1175 = vmatpush1.bf16.msra.mxu0 0
    %1176 = vmatprep.subr.bf16.mxu0 0
    %1177 = vmatpush1.bf16.msra.mxu0 0
    %1178 = vmatprep.subr.bf16.mxu0 0
    %1179 = vmatpush1.bf16.msra.mxu0 0
    %1180 = vmatprep.subr.bf16.mxu0 0
    %1181 = vmatpush1.bf16.msra.mxu0 0
    %1182 = vmatprep.subr.bf16.mxu0 0
    %1183 = vmatpush1.bf16.msra.mxu0 0
    %1184 = vmatprep.subr.bf16.mxu0 0
    %1185 = vmatpush1.bf16.msra.mxu0 0
    %1186 = vmatprep.subr.bf16.mxu0 0
    %1187 = vmatpush1.bf16.msra.mxu0 0
    %1188 = vmatprep.subr.bf16.mxu0 0
    %1189 = vmatpush1.bf16.msra.mxu0 0
    %1190 = vmatprep.subr.bf16.mxu0 0
    %1191 = vmatpush1.bf16.msra.mxu0 0
    %1192 = vmatprep.mubr.bf16.mxu0 0
    %1193 = vmatmul.mubr.bf16.gmra.mrb[0].mxu0 %v1158
    %v1194 = vpop.f32.mrb[0].mxu0
    %v1195 = vadd.f32 %v1144, %v1194
    %v1196 = vpop.f32.mrb[0].mxu0
    %v1197 = vpop.f32.mrb[0].mxu0
    %v1198 = vadd.f32 %v1144, %v1197
    %v1199 = vpop.f32.mrb[0].mxu0
    %1200 = vdwg.mxu0
    %v1201 = vadd.f32 %v188, %v1195
    %v1202 = vadd.f32 %v191, %v1198
    %v1203 = vsel %vm149, %v1201, 0.0
    %1204 = vadd.xlane.f32.xlu0 %v1203
    %v1205 = vpop.xlane.xlu0 %1204
    %v1206 = vsel %vm149, %v1202, 0.0
    %1207 = vadd.xlane.f32.xlu0 %v1206
    %v1208 = vpop.xlane.xlu0 %1207
    %v1209 = vrcp.pop 32.0
    %v1210 = vmul.f32 %v1205, %v1209
    %v1211 = vmul.f32 %v1208, %v1209
    %v1212 = vsub.f32 %v1201, %v1210
    %v1213 = vsub.f32 %v1202, %v1211
    %v1214 = vmul.f32 %v1212, %v1212
    %v1215 = vmul.f32 %v1213, %v1213
    %v1216 = vsel %vm149, %v1214, 0.0
    %1217 = vadd.xlane.f32.xlu0 %v1216
    %v1218 = vpop.xlane.xlu0 %1217
    %v1219 = vsel %vm149, %v1215, 0.0
    %1220 = vadd.xlane.f32.xlu0 %v1219
    %v1221 = vpop.xlane.xlu0 %1220
    %v1222 = vmul.f32 %v1218, %v1209
    %v1223 = vmul.f32 %v1221, %v1209
    %v1224 = vadd.f32 %v1222, 1e-05
    %v1225 = vadd.f32 %v1223, 1e-05
    %v1226 = vrsqrt.pop %v1224
    %v1227 = vrsqrt.pop %v1225
    %v1228 = vmul.f32 %v1212, %v1226
    %v1229 = vmul.f32 %v1213, %v1227
    %v1230 = vlaneseq
    %v1231 = vshrl.u32 %v1230, 7
    %v1232 = vsub.s32 5, %v1231
    %v1233 = vrot.slane %v126, %v1232
    %v1234 = vmul.f32 %v1228, %v1233
    %v1235 = vmul.f32 %v1229, %v1233
    %v1236 = vlaneseq
    %v1237 = vshrl.u32 %v1236, 7
    %v1238 = vsub.s32 6, %v1237
    %v1239 = vrot.slane %v126, %v1238
    %v1240 = vadd.f32 %v1234, %v1239
    %v1241 = vadd.f32 %v1235, %v1239
    %v1242 = vld [vmem:[#allocation8] sm:$0xff]
    %v1243 = vld [vmem:[#allocation8 + $0x8] sm:$0xff]
    %v1244 = vld [vmem:[#allocation8 + $0x10] sm:$0xff]
    %v1245 = vld [vmem:[#allocation8 + $0x18] sm:$0xff]
    %v1246 = vld [vmem:[#allocation8 + $0x20] sm:$0xff]
    %v1247 = vld [vmem:[#allocation8 + $0x28] sm:$0xff]
    %v1248 = vld [vmem:[#allocation8 + $0x30] sm:$0xff]
    %v1249 = vld [vmem:[#allocation8 + $0x38] sm:$0xff]
    %v1250 = vld [vmem:[#allocation8 + $0x40] sm:$0xff]
    %v1251 = vld [vmem:[#allocation8 + $0x48] sm:$0xff]
    %v1252 = vld [vmem:[#allocation8 + $0x50] sm:$0xff]
    %v1253 = vld [vmem:[#allocation8 + $0x58] sm:$0xff]
    %v1254 = vld [vmem:[#allocation8 + $0x60] sm:$0xff]
    %v1255 = vld [vmem:[#allocation8 + $0x68] sm:$0xff]
    %v1256 = vld [vmem:[#allocation8 + $0x70] sm:$0xff]
    %v1257 = vld [vmem:[#allocation8 + $0x78] sm:$0xff]
    %v1258 = vld [vmem:[#allocation8 + $0x80] sm:$0xff]
    %v1259 = vld [vmem:[#allocation8 + $0x88] sm:$0xff]
    %v1260 = vld [vmem:[#allocation8 + $0x90] sm:$0xff]
    %v1261 = vld [vmem:[#allocation8 + $0x98] sm:$0xff]
    %v1262 = vld [vmem:[#allocation8 + $0xa0] sm:$0xff]
    %v1263 = vld [vmem:[#allocation8 + $0xa8] sm:$0xff]
    %v1264 = vld [vmem:[#allocation8 + $0xb0] sm:$0xff]
    %v1265 = vld [vmem:[#allocation8 + $0xb8] sm:$0xff]
    %v1266 = vld [vmem:[#allocation8 + $0xc0] sm:$0xff]
    %v1267 = vld [vmem:[#allocation8 + $0xc8] sm:$0xff]
    %v1268 = vld [vmem:[#allocation8 + $0xd0] sm:$0xff]
    %v1269 = vld [vmem:[#allocation8 + $0xd8] sm:$0xff]
    %v1270 = vld [vmem:[#allocation8 + $0xe0] sm:$0xff]
    %v1271 = vld [vmem:[#allocation8 + $0xe8] sm:$0xff]
    %v1272 = vld [vmem:[#allocation8 + $0xf0] sm:$0xff]
    %v1273 = vld [vmem:[#allocation8 + $0xf8] sm:$0xff]
    %v1274 = vpack.c.bf16 %v1241, %v1240
    %v1275 = vld [vmem:[#allocation10] sm:$0xff]
    %v1276 = vld [vmem:[#allocation10 + $0x8] sm:$0xff]
    %v1279 = vlaneseq
    %v1280 = vshrl.u32 %v1279, 7
    %v1281 = vsub.s32 0, %v1280
    %v1282 = vrot.slane %v1275, %v1281
    %v1283 = vlaneseq
    %v1284 = vshrl.u32 %v1283, 7
    %v1285 = vsub.s32 1, %v1284
    %v1286 = vrot.slane %v1275, %v1285
    %v1287 = vlaneseq
    %v1288 = vshrl.u32 %v1287, 7
    %v1289 = vsub.s32 2, %v1288
    %v1290 = vrot.slane %v1275, %v1289
    %v1291 = vlaneseq
    %v1292 = vshrl.u32 %v1291, 7
    %v1293 = vsub.s32 3, %v1292
    %v1294 = vrot.slane %v1275, %v1293
    %v1295 = vlaneseq
    %v1296 = vshrl.u32 %v1295, 7
    %v1297 = vsub.s32 4, %v1296
    %v1298 = vrot.slane %v1275, %v1297
    %v1299 = vlaneseq
    %v1300 = vshrl.u32 %v1299, 7
    %v1301 = vsub.s32 5, %v1300
    %v1302 = vrot.slane %v1275, %v1301
    %v1303 = vlaneseq
    %v1304 = vshrl.u32 %v1303, 7
    %v1305 = vsub.s32 6, %v1304
    %v1306 = vrot.slane %v1275, %v1305
    %v1307 = vlaneseq
    %v1308 = vshrl.u32 %v1307, 7
    %v1309 = vsub.s32 7, %v1308
    %v1310 = vrot.slane %v1275, %v1309
    %v1311 = vlaneseq
    %v1312 = vshrl.u32 %v1311, 7
    %v1313 = vsub.s32 0, %v1312
    %v1314 = vrot.slane %v1276, %v1313
    %v1315 = vlaneseq
    %v1316 = vshrl.u32 %v1315, 7
    %v1317 = vsub.s32 1, %v1316
    %v1318 = vrot.slane %v1276, %v1317
    %v1319 = vlaneseq
    %v1320 = vshrl.u32 %v1319, 7
    %v1321 = vsub.s32 2, %v1320
    %v1322 = vrot.slane %v1276, %v1321
    %v1323 = vlaneseq
    %v1324 = vshrl.u32 %v1323, 7
    %v1325 = vsub.s32 3, %v1324
    %v1326 = vrot.slane %v1276, %v1325
    %v1327 = vlaneseq
    %v1328 = vshrl.u32 %v1327, 7
    %v1329 = vsub.s32 4, %v1328
    %v1330 = vrot.slane %v1276, %v1329
    %v1331 = vlaneseq
    %v1332 = vshrl.u32 %v1331, 7
    %v1333 = vsub.s32 5, %v1332
    %v1334 = vrot.slane %v1276, %v1333
    %v1335 = vlaneseq
    %v1336 = vshrl.u32 %v1335, 7
    %v1337 = vsub.s32 6, %v1336
    %v1338 = vrot.slane %v1276, %v1337
    %v1339 = vlaneseq
    %v1340 = vshrl.u32 %v1339, 7
    %v1341 = vsub.s32 7, %v1340
    %v1342 = vrot.slane %v1276, %v1341
    %v1391 = vunpack.c.l.b16 %v1242
    %v1392 = vunpack.c.h.b16 %v1242
    %v1393 = vunpack.c.l.b16 %v1243
    %v1394 = vunpack.c.h.b16 %v1243
    %v1395 = vunpack.c.l.b16 %v1244
    %v1396 = vunpack.c.h.b16 %v1244
    %v1397 = vunpack.c.l.b16 %v1245
    %v1398 = vunpack.c.h.b16 %v1245
    %v1399 = vunpack.c.l.b16 %v1246
    %v1400 = vunpack.c.h.b16 %v1246
    %v1401 = vunpack.c.l.b16 %v1247
    %v1402 = vunpack.c.h.b16 %v1247
    %v1403 = vunpack.c.l.b16 %v1248
    %v1404 = vunpack.c.h.b16 %v1248
    %v1405 = vunpack.c.l.b16 %v1249
    %v1406 = vunpack.c.h.b16 %v1249
    %v1407 = vunpack.c.l.b16 %v1250
    %v1408 = vunpack.c.h.b16 %v1250
    %v1409 = vunpack.c.l.b16 %v1251
    %v1410 = vunpack.c.h.b16 %v1251
    %v1411 = vunpack.c.l.b16 %v1252
    %v1412 = vunpack.c.h.b16 %v1252
    %v1413 = vunpack.c.l.b16 %v1253
    %v1414 = vunpack.c.h.b16 %v1253
    %v1415 = vunpack.c.l.b16 %v1254
    %v1416 = vunpack.c.h.b16 %v1254
    %v1417 = vunpack.c.l.b16 %v1255
    %v1418 = vunpack.c.h.b16 %v1255
    %v1419 = vunpack.c.l.b16 %v1256
    %v1420 = vunpack.c.h.b16 %v1256
    %v1421 = vunpack.c.l.b16 %v1257
    %v1422 = vunpack.c.h.b16 %v1257
    %v1423 = vunpack.c.l.b16 %v1258
    %v1424 = vunpack.c.h.b16 %v1258
    %v1425 = vunpack.c.l.b16 %v1259
    %v1426 = vunpack.c.h.b16 %v1259
    %v1427 = vunpack.c.l.b16 %v1260
    %v1428 = vunpack.c.h.b16 %v1260
    %v1429 = vunpack.c.l.b16 %v1261
    %v1430 = vunpack.c.h.b16 %v1261
    %v1431 = vunpack.c.l.b16 %v1262
    %v1432 = vunpack.c.h.b16 %v1262
    %v1433 = vunpack.c.l.b16 %v1263
    %v1434 = vunpack.c.h.b16 %v1263
    %v1435 = vunpack.c.l.b16 %v1264
    %v1436 = vunpack.c.h.b16 %v1264
    %v1437 = vunpack.c.l.b16 %v1265
    %v1438 = vunpack.c.h.b16 %v1265
    %v1439 = vunpack.c.l.b16 %v1266
    %v1440 = vunpack.c.h.b16 %v1266
    %v1441 = vunpack.c.l.b16 %v1267
    %v1442 = vunpack.c.h.b16 %v1267
    %v1443 = vunpack.c.l.b16 %v1268
    %v1444 = vunpack.c.h.b16 %v1268
    %v1445 = vunpack.c.l.b16 %v1269
    %v1446 = vunpack.c.h.b16 %v1269
    %v1447 = vunpack.c.l.b16 %v1270
    %v1448 = vunpack.c.h.b16 %v1270
    %v1449 = vunpack.c.l.b16 %v1271
    %v1450 = vunpack.c.h.b16 %v1271
    %v1451 = vunpack.c.l.b16 %v1272
    %v1452 = vunpack.c.h.b16 %v1272
    %v1453 = vunpack.c.l.b16 %v1273
    %v1454 = vunpack.c.h.b16 %v1273
    %v1455 = vpack.c.b16 %v1407, %v1391
    %v1456 = vpack.c.b16 %v1408, %v1392
    %v1457 = vpack.c.b16 %v1409, %v1393
    %v1458 = vpack.c.b16 %v1410, %v1394
    %v1459 = vpack.c.b16 %v1411, %v1395
    %v1460 = vpack.c.b16 %v1412, %v1396
    %v1461 = vpack.c.b16 %v1413, %v1397
    %v1462 = vpack.c.b16 %v1414, %v1398
    %v1463 = vpack.c.b16 %v1415, %v1399
    %v1464 = vpack.c.b16 %v1416, %v1400
    %v1465 = vpack.c.b16 %v1417, %v1401
    %v1466 = vpack.c.b16 %v1418, %v1402
    %v1467 = vpack.c.b16 %v1419, %v1403
    %v1468 = vpack.c.b16 %v1420, %v1404
    %v1469 = vpack.c.b16 %v1421, %v1405
    %v1470 = vpack.c.b16 %v1422, %v1406
    %v1471 = vpack.c.b16 %v1439, %v1423
    %v1472 = vpack.c.b16 %v1440, %v1424
    %v1473 = vpack.c.b16 %v1441, %v1425
    %v1474 = vpack.c.b16 %v1442, %v1426
    %v1475 = vpack.c.b16 %v1443, %v1427
    %v1476 = vpack.c.b16 %v1444, %v1428
    %v1477 = vpack.c.b16 %v1445, %v1429
    %v1478 = vpack.c.b16 %v1446, %v1430
    %v1479 = vpack.c.b16 %v1447, %v1431
    %v1480 = vpack.c.b16 %v1448, %v1432
    %v1481 = vpack.c.b16 %v1449, %v1433
    %v1482 = vpack.c.b16 %v1450, %v1434
    %v1483 = vpack.c.b16 %v1451, %v1435
    %v1484 = vpack.c.b16 %v1452, %v1436
    %v1485 = vpack.c.b16 %v1453, %v1437
    %v1486 = vpack.c.b16 %v1454, %v1438
    %v1520 = vsel %vm149, %v1274, 0
    %1522 = vmatprep.subr.bf16.mxu0 %v1456
    %1523 = vmatpush1.bf16.msra.mxu0 %v1455
    %1524 = vmatprep.subr.bf16.mxu0 %v1472
    %1525 = vmatpush1.bf16.msra.mxu0 %v1471
    %1526 = vmatprep.subr.bf16.mxu0 0
    %1527 = vmatpush1.bf16.msra.mxu0 0
    %1528 = vmatprep.subr.bf16.mxu0 0
    %1529 = vmatpush1.bf16.msra.mxu0 0
    %1530 = vmatprep.subr.bf16.mxu0 0
    %1531 = vmatpush1.bf16.msra.mxu0 0
    %1532 = vmatprep.subr.bf16.mxu0 0
    %1533 = vmatpush1.bf16.msra.mxu0 0
    %1534 = vmatprep.subr.bf16.mxu0 0
    %1535 = vmatpush1.bf16.msra.mxu0 0
    %1536 = vmatprep.subr.bf16.mxu0 0
    %1537 = vmatpush1.bf16.msra.mxu0 0
    %1538 = vmatprep.subr.bf16.mxu0 0
    %1539 = vmatpush1.bf16.msra.mxu0 0
    %1540 = vmatprep.subr.bf16.mxu0 0
    %1541 = vmatpush1.bf16.msra.mxu0 0
    %1542 = vmatprep.subr.bf16.mxu0 0
    %1543 = vmatpush1.bf16.msra.mxu0 0
    %1544 = vmatprep.subr.bf16.mxu0 0
    %1545 = vmatpush1.bf16.msra.mxu0 0
    %1546 = vmatprep.subr.bf16.mxu0 0
    %1547 = vmatpush1.bf16.msra.mxu0 0
    %1548 = vmatprep.subr.bf16.mxu0 0
    %1549 = vmatpush1.bf16.msra.mxu0 0
    %1550 = vmatprep.subr.bf16.mxu0 0
    %1551 = vmatpush1.bf16.msra.mxu0 0
    %1552 = vmatprep.subr.bf16.mxu0 0
    %1553 = vmatpush1.bf16.msra.mxu0 0
    %1554 = vmatprep.mubr.bf16.mxu0 0
    %1555 = vmatmul.mubr.bf16.gmra.mrb[0].mxu0 %v1520
    %v1556 = vpop.f32.mrb[0].mxu0
    %v1557 = vadd.f32 %v1282, %v1556
    %v1558 = vpop.f32.mrb[0].mxu0
    %v1559 = vadd.f32 %v1286, %v1558
    %v1560 = vpop.f32.mrb[0].mxu0
    %v1561 = vadd.f32 %v1282, %v1560
    %v1562 = vpop.f32.mrb[0].mxu0
    %v1563 = vadd.f32 %v1286, %v1562
    %1564 = vdwg.mxu0
    %1565 = vmatprep.subr.bf16.mxu0 %v1458
    %1566 = vmatpush1.bf16.msra.mxu0 %v1457
    %1567 = vmatprep.subr.bf16.mxu0 %v1474
    %1568 = vmatpush1.bf16.msra.mxu0 %v1473
    %1569 = vmatprep.subr.bf16.mxu0 0
    %1570 = vmatpush1.bf16.msra.mxu0 0
    %1571 = vmatprep.subr.bf16.mxu0 0
    %1572 = vmatpush1.bf16.msra.mxu0 0
    %1573 = vmatprep.subr.bf16.mxu0 0
    %1574 = vmatpush1.bf16.msra.mxu0 0
    %1575 = vmatprep.subr.bf16.mxu0 0
    %1576 = vmatpush1.bf16.msra.mxu0 0
    %1577 = vmatprep.subr.bf16.mxu0 0
    %1578 = vmatpush1.bf16.msra.mxu0 0
    %1579 = vmatprep.subr.bf16.mxu0 0
    %1580 = vmatpush1.bf16.msra.mxu0 0
    %1581 = vmatprep.subr.bf16.mxu0 0
    %1582 = vmatpush1.bf16.msra.mxu0 0
    %1583 = vmatprep.subr.bf16.mxu0 0
    %1584 = vmatpush1.bf16.msra.mxu0 0
    %1585 = vmatprep.subr.bf16.mxu0 0
    %1586 = vmatpush1.bf16.msra.mxu0 0
    %1587 = vmatprep.subr.bf16.mxu0 0
    %1588 = vmatpush1.bf16.msra.mxu0 0
    %1589 = vmatprep.subr.bf16.mxu0 0
    %1590 = vmatpush1.bf16.msra.mxu0 0
    %1591 = vmatprep.subr.bf16.mxu0 0
    %1592 = vmatpush1.bf16.msra.mxu0 0
    %1593 = vmatprep.subr.bf16.mxu0 0
    %1594 = vmatpush1.bf16.msra.mxu0 0
    %1595 = vmatprep.subr.bf16.mxu0 0
    %1596 = vmatpush1.bf16.msra.mxu0 0
    %1597 = vmatprep.mubr.bf16.mxu0 0
    %1598 = vmatmul.mubr.bf16.gmra.mrb[0].mxu0 %v1520
    %v1599 = vpop.f32.mrb[0].mxu0
    %v1600 = vadd.f32 %v1290, %v1599
    %v1601 = vpop.f32.mrb[0].mxu0
    %v1602 = vadd.f32 %v1294, %v1601
    %v1603 = vpop.f32.mrb[0].mxu0
    %v1604 = vadd.f32 %v1290, %v1603
    %v1605 = vpop.f32.mrb[0].mxu0
    %v1606 = vadd.f32 %v1294, %v1605
    %1607 = vdwg.mxu0
    %1608 = vmatprep.subr.bf16.mxu0 %v1460
    %1609 = vmatpush1.bf16.msra.mxu0 %v1459
    %1610 = vmatprep.subr.bf16.mxu0 %v1476
    %1611 = vmatpush1.bf16.msra.mxu0 %v1475
    %1612 = vmatprep.subr.bf16.mxu0 0
    %1613 = vmatpush1.bf16.msra.mxu0 0
    %1614 = vmatprep.subr.bf16.mxu0 0
    %1615 = vmatpush1.bf16.msra.mxu0 0
    %1616 = vmatprep.subr.bf16.mxu0 0
    %1617 = vmatpush1.bf16.msra.mxu0 0
    %1618 = vmatprep.subr.bf16.mxu0 0
    %1619 = vmatpush1.bf16.msra.mxu0 0
    %1620 = vmatprep.subr.bf16.mxu0 0
    %1621 = vmatpush1.bf16.msra.mxu0 0
    %1622 = vmatprep.subr.bf16.mxu0 0
    %1623 = vmatpush1.bf16.msra.mxu0 0
    %1624 = vmatprep.subr.bf16.mxu0 0
    %1625 = vmatpush1.bf16.msra.mxu0 0
    %1626 = vmatprep.subr.bf16.mxu0 0
    %1627 = vmatpush1.bf16.msra.mxu0 0
    %1628 = vmatprep.subr.bf16.mxu0 0
    %1629 = vmatpush1.bf16.msra.mxu0 0
    %1630 = vmatprep.subr.bf16.mxu0 0
    %1631 = vmatpush1.bf16.msra.mxu0 0
    %1632 = vmatprep.subr.bf16.mxu0 0
    %1633 = vmatpush1.bf16.msra.mxu0 0
    %1634 = vmatprep.subr.bf16.mxu0 0
    %1635 = vmatpush1.bf16.msra.mxu0 0
    %1636 = vmatprep.subr.bf16.mxu0 0
    %1637 = vmatpush1.bf16.msra.mxu0 0
    %1638 = vmatprep.subr.bf16.mxu0 0
    %1639 = vmatpush1.bf16.msra.mxu0 0
    %1640 = vmatprep.mubr.bf16.mxu0 0
    %1641 = vmatmul.mubr.bf16.gmra.mrb[0].mxu0 %v1520
    %v1642 = vpop.f32.mrb[0].mxu0
    %v1643 = vadd.f32 %v1298, %v1642
    %v1644 = vpop.f32.mrb[0].mxu0
    %v1645 = vadd.f32 %v1302, %v1644
    %v1646 = vpop.f32.mrb[0].mxu0
    %v1647 = vadd.f32 %v1298, %v1646
    %v1648 = vpop.f32.mrb[0].mxu0
    %v1649 = vadd.f32 %v1302, %v1648
    %1650 = vdwg.mxu0
    %1651 = vmatprep.subr.bf16.mxu0 %v1462
    %1652 = vmatpush1.bf16.msra.mxu0 %v1461
    %1653 = vmatprep.subr.bf16.mxu0 %v1478
    %1654 = vmatpush1.bf16.msra.mxu0 %v1477
    %1655 = vmatprep.subr.bf16.mxu0 0
    %1656 = vmatpush1.bf16.msra.mxu0 0
    %1657 = vmatprep.subr.bf16.mxu0 0
    %1658 = vmatpush1.bf16.msra.mxu0 0
    %1659 = vmatprep.subr.bf16.mxu0 0
    %1660 = vmatpush1.bf16.msra.mxu0 0
    %1661 = vmatprep.subr.bf16.mxu0 0
    %1662 = vmatpush1.bf16.msra.mxu0 0
    %1663 = vmatprep.subr.bf16.mxu0 0
    %1664 = vmatpush1.bf16.msra.mxu0 0
    %1665 = vmatprep.subr.bf16.mxu0 0
    %1666 = vmatpush1.bf16.msra.mxu0 0
    %1667 = vmatprep.subr.bf16.mxu0 0
    %1668 = vmatpush1.bf16.msra.mxu0 0
    %1669 = vmatprep.subr.bf16.mxu0 0
    %1670 = vmatpush1.bf16.msra.mxu0 0
    %1671 = vmatprep.subr.bf16.mxu0 0
    %1672 = vmatpush1.bf16.msra.mxu0 0
    %1673 = vmatprep.subr.bf16.mxu0 0
    %1674 = vmatpush1.bf16.msra.mxu0 0
    %1675 = vmatprep.subr.bf16.mxu0 0
    %1676 = vmatpush1.bf16.msra.mxu0 0
    %1677 = vmatprep.subr.bf16.mxu0 0
    %1678 = vmatpush1.bf16.msra.mxu0 0
    %1679 = vmatprep.subr.bf16.mxu0 0
    %1680 = vmatpush1.bf16.msra.mxu0 0
    %1681 = vmatprep.subr.bf16.mxu0 0
    %1682 = vmatpush1.bf16.msra.mxu0 0
    %1683 = vmatprep.mubr.bf16.mxu0 0
    %1684 = vmatmul.mubr.bf16.gmra.mrb[0].mxu0 %v1520
    %v1685 = vpop.f32.mrb[0].mxu0
    %v1686 = vadd.f32 %v1306, %v1685
    %v1687 = vpop.f32.mrb[0].mxu0
    %v1688 = vadd.f32 %v1310, %v1687
    %v1689 = vpop.f32.mrb[0].mxu0
    %v1690 = vadd.f32 %v1306, %v1689
    %v1691 = vpop.f32.mrb[0].mxu0
    %v1692 = vadd.f32 %v1310, %v1691
    %1693 = vdwg.mxu0
    %1694 = vmatprep.subr.bf16.mxu0 %v1464
    %1695 = vmatpush1.bf16.msra.mxu0 %v1463
    %1696 = vmatprep.subr.bf16.mxu0 %v1480
    %1697 = vmatpush1.bf16.msra.mxu0 %v1479
    %1698 = vmatprep.subr.bf16.mxu0 0
    %1699 = vmatpush1.bf16.msra.mxu0 0
    %1700 = vmatprep.subr.bf16.mxu0 0
    %1701 = vmatpush1.bf16.msra.mxu0 0
    %1702 = vmatprep.subr.bf16.mxu0 0
    %1703 = vmatpush1.bf16.msra.mxu0 0
    %1704 = vmatprep.subr.bf16.mxu0 0
    %1705 = vmatpush1.bf16.msra.mxu0 0
    %1706 = vmatprep.subr.bf16.mxu0 0
    %1707 = vmatpush1.bf16.msra.mxu0 0
    %1708 = vmatprep.subr.bf16.mxu0 0
    %1709 = vmatpush1.bf16.msra.mxu0 0
    %1710 = vmatprep.subr.bf16.mxu0 0
    %1711 = vmatpush1.bf16.msra.mxu0 0
    %1712 = vmatprep.subr.bf16.mxu0 0
    %1713 = vmatpush1.bf16.msra.mxu0 0
    %1714 = vmatprep.subr.bf16.mxu0 0
    %1715 = vmatpush1.bf16.msra.mxu0 0
    %1716 = vmatprep.subr.bf16.mxu0 0
    %1717 = vmatpush1.bf16.msra.mxu0 0
    %1718 = vmatprep.subr.bf16.mxu0 0
    %1719 = vmatpush1.bf16.msra.mxu0 0
    %1720 = vmatprep.subr.bf16.mxu0 0
    %1721 = vmatpush1.bf16.msra.mxu0 0
    %1722 = vmatprep.subr.bf16.mxu0 0
    %1723 = vmatpush1.bf16.msra.mxu0 0
    %1724 = vmatprep.subr.bf16.mxu0 0
    %1725 = vmatpush1.bf16.msra.mxu0 0
    %1726 = vmatprep.mubr.bf16.mxu0 0
    %1727 = vmatmul.mubr.bf16.gmra.mrb[0].mxu0 %v1520
    %v1728 = vpop.f32.mrb[0].mxu0
    %v1729 = vadd.f32 %v1314, %v1728
    %v1730 = vpop.f32.mrb[0].mxu0
    %v1731 = vadd.f32 %v1318, %v1730
    %v1732 = vpop.f32.mrb[0].mxu0
    %v1733 = vadd.f32 %v1314, %v1732
    %v1734 = vpop.f32.mrb[0].mxu0
    %v1735 = vadd.f32 %v1318, %v1734
    %1736 = vdwg.mxu0
    %1737 = vmatprep.subr.bf16.mxu0 %v1466
    %1738 = vmatpush1.bf16.msra.mxu0 %v1465
    %1739 = vmatprep.subr.bf16.mxu0 %v1482
    %1740 = vmatpush1.bf16.msra.mxu0 %v1481
    %1741 = vmatprep.subr.bf16.mxu0 0
    %1742 = vmatpush1.bf16.msra.mxu0 0
    %1743 = vmatprep.subr.bf16.mxu0 0
    %1744 = vmatpush1.bf16.msra.mxu0 0
    %1745 = vmatprep.subr.bf16.mxu0 0
    %1746 = vmatpush1.bf16.msra.mxu0 0
    %1747 = vmatprep.subr.bf16.mxu0 0
    %1748 = vmatpush1.bf16.msra.mxu0 0
    %1749 = vmatprep.subr.bf16.mxu0 0
    %1750 = vmatpush1.bf16.msra.mxu0 0
    %1751 = vmatprep.subr.bf16.mxu0 0
    %1752 = vmatpush1.bf16.msra.mxu0 0
    %1753 = vmatprep.subr.bf16.mxu0 0
    %1754 = vmatpush1.bf16.msra.mxu0 0
    %1755 = vmatprep.subr.bf16.mxu0 0
    %1756 = vmatpush1.bf16.msra.mxu0 0
    %1757 = vmatprep.subr.bf16.mxu0 0
    %1758 = vmatpush1.bf16.msra.mxu0 0
    %1759 = vmatprep.subr.bf16.mxu0 0
    %1760 = vmatpush1.bf16.msra.mxu0 0
    %1761 = vmatprep.subr.bf16.mxu0 0
    %1762 = vmatpush1.bf16.msra.mxu0 0
    %1763 = vmatprep.subr.bf16.mxu0 0
    %1764 = vmatpush1.bf16.msra.mxu0 0
    %1765 = vmatprep.subr.bf16.mxu0 0
    %1766 = vmatpush1.bf16.msra.mxu0 0
    %1767 = vmatprep.subr.bf16.mxu0 0
    %1768 = vmatpush1.bf16.msra.mxu0 0
    %1769 = vmatprep.mubr.bf16.mxu0 0
    %1770 = vmatmul.mubr.bf16.gmra.mrb[0].mxu0 %v1520
    %v1771 = vpop.f32.mrb[0].mxu0
    %v1772 = vadd.f32 %v1322, %v1771
    %v1773 = vpop.f32.mrb[0].mxu0
    %v1774 = vadd.f32 %v1326, %v1773
    %v1775 = vpop.f32.mrb[0].mxu0
    %v1776 = vadd.f32 %v1322, %v1775
    %v1777 = vpop.f32.mrb[0].mxu0
    %v1778 = vadd.f32 %v1326, %v1777
    %1779 = vdwg.mxu0
    %1780 = vmatprep.subr.bf16.mxu0 %v1468
    %1781 = vmatpush1.bf16.msra.mxu0 %v1467
    %1782 = vmatprep.subr.bf16.mxu0 %v1484
    %1783 = vmatpush1.bf16.msra.mxu0 %v1483
    %1784 = vmatprep.subr.bf16.mxu0 0
    %1785 = vmatpush1.bf16.msra.mxu0 0
    %1786 = vmatprep.subr.bf16.mxu0 0
    %1787 = vmatpush1.bf16.msra.mxu0 0
    %1788 = vmatprep.subr.bf16.mxu0 0
    %1789 = vmatpush1.bf16.msra.mxu0 0
    %1790 = vmatprep.subr.bf16.mxu0 0
    %1791 = vmatpush1.bf16.msra.mxu0 0
    %1792 = vmatprep.subr.bf16.mxu0 0
    %1793 = vmatpush1.bf16.msra.mxu0 0
    %1794 = vmatprep.subr.bf16.mxu0 0
    %1795 = vmatpush1.bf16.msra.mxu0 0
    %1796 = vmatprep.subr.bf16.mxu0 0
    %1797 = vmatpush1.bf16.msra.mxu0 0
    %1798 = vmatprep.subr.bf16.mxu0 0
    %1799 = vmatpush1.bf16.msra.mxu0 0
    %1800 = vmatprep.subr.bf16.mxu0 0
    %1801 = vmatpush1.bf16.msra.mxu0 0
    %1802 = vmatprep.subr.bf16.mxu0 0
    %1803 = vmatpush1.bf16.msra.mxu0 0
    %1804 = vmatprep.subr.bf16.mxu0 0
    %1805 = vmatpush1.bf16.msra.mxu0 0
    %1806 = vmatprep.subr.bf16.mxu0 0
    %1807 = vmatpush1.bf16.msra.mxu0 0
    %1808 = vmatprep.subr.bf16.mxu0 0
    %1809 = vmatpush1.bf16.msra.mxu0 0
    %1810 = vmatprep.subr.bf16.mxu0 0
    %1811 = vmatpush1.bf16.msra.mxu0 0
    %1812 = vmatprep.mubr.bf16.mxu0 0
    %1813 = vmatmul.mubr.bf16.gmra.mrb[0].mxu0 %v1520
    %v1814 = vpop.f32.mrb[0].mxu0
    %v1815 = vadd.f32 %v1330, %v1814
    %v1816 = vpop.f32.mrb[0].mxu0
    %v1817 = vadd.f32 %v1334, %v1816
    %v1818 = vpop.f32.mrb[0].mxu0
    %v1819 = vadd.f32 %v1330, %v1818
    %v1820 = vpop.f32.mrb[0].mxu0
    %v1821 = vadd.f32 %v1334, %v1820
    %1822 = vdwg.mxu0
    %1823 = vmatprep.subr.bf16.mxu0 %v1470
    %1824 = vmatpush1.bf16.msra.mxu0 %v1469
    %1825 = vmatprep.subr.bf16.mxu0 %v1486
    %1826 = vmatpush1.bf16.msra.mxu0 %v1485
    %1827 = vmatprep.subr.bf16.mxu0 0
    %1828 = vmatpush1.bf16.msra.mxu0 0
    %1829 = vmatprep.subr.bf16.mxu0 0
    %1830 = vmatpush1.bf16.msra.mxu0 0
    %1831 = vmatprep.subr.bf16.mxu0 0
    %1832 = vmatpush1.bf16.msra.mxu0 0
    %1833 = vmatprep.subr.bf16.mxu0 0
    %1834 = vmatpush1.bf16.msra.mxu0 0
    %1835 = vmatprep.subr.bf16.mxu0 0
    %1836 = vmatpush1.bf16.msra.mxu0 0
    %1837 = vmatprep.subr.bf16.mxu0 0
    %1838 = vmatpush1.bf16.msra.mxu0 0
    %1839 = vmatprep.subr.bf16.mxu0 0
    %1840 = vmatpush1.bf16.msra.mxu0 0
    %1841 = vmatprep.subr.bf16.mxu0 0
    %1842 = vmatpush1.bf16.msra.mxu0 0
    %1843 = vmatprep.subr.bf16.mxu0 0
    %1844 = vmatpush1.bf16.msra.mxu0 0
    %1845 = vmatprep.subr.bf16.mxu0 0
    %1846 = vmatpush1.bf16.msra.mxu0 0
    %1847 = vmatprep.subr.bf16.mxu0 0
    %1848 = vmatpush1.bf16.msra.mxu0 0
    %1849 = vmatprep.subr.bf16.mxu0 0
    %1850 = vmatpush1.bf16.msra.mxu0 0
    %1851 = vmatprep.subr.bf16.mxu0 0
    %1852 = vmatpush1.bf16.msra.mxu0 0
    %1853 = vmatprep.subr.bf16.mxu0 0
    %1854 = vmatpush1.bf16.msra.mxu0 0
    %1855 = vmatprep.mubr.bf16.mxu0 0
    %1856 = vmatmul.mubr.bf16.gmra.mrb[0].mxu0 %v1520
    %v1857 = vpop.f32.mrb[0].mxu0
    %v1858 = vadd.f32 %v1338, %v1857
    %v1859 = vpop.f32.mrb[0].mxu0
    %v1860 = vadd.f32 %v1342, %v1859
    %v1861 = vpop.f32.mrb[0].mxu0
    %v1862 = vadd.f32 %v1338, %v1861
    %v1863 = vpop.f32.mrb[0].mxu0
    %v1864 = vadd.f32 %v1342, %v1863
    %1865 = vdwg.mxu0
    %v1866 = vmax.f32 %v1557, 0.0
    %v1867 = vmax.f32 %v1559, 0.0
    %v1868 = vmax.f32 %v1600, 0.0
    %v1869 = vmax.f32 %v1602, 0.0
    %v1870 = vmax.f32 %v1643, 0.0
    %v1871 = vmax.f32 %v1645, 0.0
    %v1872 = vmax.f32 %v1686, 0.0
    %v1873 = vmax.f32 %v1688, 0.0
    %v1874 = vmax.f32 %v1729, 0.0
    %v1875 = vmax.f32 %v1731, 0.0
    %v1876 = vmax.f32 %v1772, 0.0
    %v1877 = vmax.f32 %v1774, 0.0
    %v1878 = vmax.f32 %v1815, 0.0
    %v1879 = vmax.f32 %v1817, 0.0
    %v1880 = vmax.f32 %v1858, 0.0
    %v1881 = vmax.f32 %v1860, 0.0
    %v1882 = vmax.f32 %v1561, 0.0
    %v1883 = vmax.f32 %v1563, 0.0
    %v1884 = vmax.f32 %v1604, 0.0
    %v1885 = vmax.f32 %v1606, 0.0
    %v1886 = vmax.f32 %v1647, 0.0
    %v1887 = vmax.f32 %v1649, 0.0
    %v1888 = vmax.f32 %v1690, 0.0
    %v1889 = vmax.f32 %v1692, 0.0
    %v1890 = vmax.f32 %v1733, 0.0
    %v1891 = vmax.f32 %v1735, 0.0
    %v1892 = vmax.f32 %v1776, 0.0
    %v1893 = vmax.f32 %v1778, 0.0
    %v1894 = vmax.f32 %v1819, 0.0
    %v1895 = vmax.f32 %v1821, 0.0
    %v1896 = vmax.f32 %v1862, 0.0
    %v1897 = vmax.f32 %v1864, 0.0
    %v1898 = vpack.c.bf16 %v1882, %v1866
    %v1899 = vpack.c.bf16 %v1883, %v1867
    %v1900 = vpack.c.bf16 %v1884, %v1868
    %v1901 = vpack.c.bf16 %v1885, %v1869
    %v1902 = vpack.c.bf16 %v1886, %v1870
    %v1903 = vpack.c.bf16 %v1887, %v1871
    %v1904 = vpack.c.bf16 %v1888, %v1872
    %v1905 = vpack.c.bf16 %v1889, %v1873
    %v1906 = vpack.c.bf16 %v1890, %v1874
    %v1907 = vpack.c.bf16 %v1891, %v1875
    %v1908 = vpack.c.bf16 %v1892, %v1876
    %v1909 = vpack.c.bf16 %v1893, %v1877
    %v1910 = vpack.c.bf16 %v1894, %v1878
    %v1911 = vpack.c.bf16 %v1895, %v1879
    %v1912 = vpack.c.bf16 %v1896, %v1880
    %v1913 = vpack.c.bf16 %v1897, %v1881
    %v1914 = vld [vmem:[#allocation11] sm:$0xff]
    %v1915 = vld [vmem:[#allocation11 + $0x8] sm:$0xff]
    %v1916 = vld [vmem:[#allocation11 + $0x10] sm:$0xff]
    %v1917 = vld [vmem:[#allocation11 + $0x18] sm:$0xff]
    %v1918 = vld [vmem:[#allocation11 + $0x20] sm:$0xff]
    %v1919 = vld [vmem:[#allocation11 + $0x28] sm:$0xff]
    %v1920 = vld [vmem:[#allocation11 + $0x30] sm:$0xff]
    %v1921 = vld [vmem:[#allocation11 + $0x38] sm:$0xff]
    %v1922 = vld [vmem:[#allocation11 + $0x40] sm:$0xff]
    %v1923 = vld [vmem:[#allocation11 + $0x48] sm:$0xff]
    %v1924 = vld [vmem:[#allocation11 + $0x50] sm:$0xff]
    %v1925 = vld [vmem:[#allocation11 + $0x58] sm:$0xff]
    %v1926 = vld [vmem:[#allocation11 + $0x60] sm:$0xff]
    %v1927 = vld [vmem:[#allocation11 + $0x68] sm:$0xff]
    %v1928 = vld [vmem:[#allocation11 + $0x70] sm:$0xff]
    %v1929 = vld [vmem:[#allocation11 + $0x78] sm:$0xff]
    %v1930 = vld [vmem:[#allocation11 + $0x80] sm:$0xff]
    %v1931 = vld [vmem:[#allocation11 + $0x88] sm:$0xff]
    %v1932 = vld [vmem:[#allocation11 + $0x90] sm:$0xff]
    %v1933 = vld [vmem:[#allocation11 + $0x98] sm:$0xff]
    %v1934 = vld [vmem:[#allocation11 + $0xa0] sm:$0xff]
    %v1935 = vld [vmem:[#allocation11 + $0xa8] sm:$0xff]
    %v1936 = vld [vmem:[#allocation11 + $0xb0] sm:$0xff]
    %v1937 = vld [vmem:[#allocation11 + $0xb8] sm:$0xff]
    %v1938 = vld [vmem:[#allocation11 + $0xc0] sm:$0xff]
    %v1939 = vld [vmem:[#allocation11 + $0xc8] sm:$0xff]
    %v1940 = vld [vmem:[#allocation11 + $0xd0] sm:$0xff]
    %v1941 = vld [vmem:[#allocation11 + $0xd8] sm:$0xff]
    %v1942 = vld [vmem:[#allocation11 + $0xe0] sm:$0xff]
    %v1943 = vld [vmem:[#allocation11 + $0xe8] sm:$0xff]
    %v1944 = vld [vmem:[#allocation11 + $0xf0] sm:$0xff]
    %v1945 = vld [vmem:[#allocation11 + $0xf8] sm:$0xff]
    %v1946 = vlaneseq
    %v1947 = vshrl.u32 %v1946, 7
    %v1948 = vsub.s32 7, %v1947
    %v1949 = vrot.slane %v126, %v1948
    %v1982 = vunpack.c.l.b16 %v1914
    %v1983 = vunpack.c.h.b16 %v1914
    %v1984 = vunpack.c.l.b16 %v1915
    %v1985 = vunpack.c.h.b16 %v1915
    %v1986 = vunpack.c.l.b16 %v1916
    %v1987 = vunpack.c.h.b16 %v1916
    %v1988 = vunpack.c.l.b16 %v1917
    %v1989 = vunpack.c.h.b16 %v1917
    %v1990 = vunpack.c.l.b16 %v1918
    %v1991 = vunpack.c.h.b16 %v1918
    %v1992 = vunpack.c.l.b16 %v1919
    %v1993 = vunpack.c.h.b16 %v1919
    %v1994 = vunpack.c.l.b16 %v1920
    %v1995 = vunpack.c.h.b16 %v1920
    %v1996 = vunpack.c.l.b16 %v1921
    %v1997 = vunpack.c.h.b16 %v1921
    %v1998 = vunpack.c.l.b16 %v1922
    %v1999 = vunpack.c.h.b16 %v1922
    %v2000 = vunpack.c.l.b16 %v1923
    %v2001 = vunpack.c.h.b16 %v1923
    %v2002 = vunpack.c.l.b16 %v1924
    %v2003 = vunpack.c.h.b16 %v1924
    %v2004 = vunpack.c.l.b16 %v1925
    %v2005 = vunpack.c.h.b16 %v1925
    %v2006 = vunpack.c.l.b16 %v1926
    %v2007 = vunpack.c.h.b16 %v1926
    %v2008 = vunpack.c.l.b16 %v1927
    %v2009 = vunpack.c.h.b16 %v1927
    %v2010 = vunpack.c.l.b16 %v1928
    %v2011 = vunpack.c.h.b16 %v1928
    %v2012 = vunpack.c.l.b16 %v1929
    %v2013 = vunpack.c.h.b16 %v1929
    %v2014 = vunpack.c.l.b16 %v1930
    %v2015 = vunpack.c.h.b16 %v1930
    %v2016 = vunpack.c.l.b16 %v1931
    %v2017 = vunpack.c.h.b16 %v1931
    %v2018 = vunpack.c.l.b16 %v1932
    %v2019 = vunpack.c.h.b16 %v1932
    %v2020 = vunpack.c.l.b16 %v1933
    %v2021 = vunpack.c.h.b16 %v1933
    %v2022 = vunpack.c.l.b16 %v1934
    %v2023 = vunpack.c.h.b16 %v1934
    %v2024 = vunpack.c.l.b16 %v1935
    %v2025 = vunpack.c.h.b16 %v1935
    %v2026 = vunpack.c.l.b16 %v1936
    %v2027 = vunpack.c.h.b16 %v1936
    %v2028 = vunpack.c.l.b16 %v1937
    %v2029 = vunpack.c.h.b16 %v1937
    %v2030 = vunpack.c.l.b16 %v1938
    %v2031 = vunpack.c.h.b16 %v1938
    %v2032 = vunpack.c.l.b16 %v1939
    %v2033 = vunpack.c.h.b16 %v1939
    %v2034 = vunpack.c.l.b16 %v1940
    %v2035 = vunpack.c.h.b16 %v1940
    %v2036 = vunpack.c.l.b16 %v1941
    %v2037 = vunpack.c.h.b16 %v1941
    %v2038 = vunpack.c.l.b16 %v1942
    %v2039 = vunpack.c.h.b16 %v1942
    %v2040 = vunpack.c.l.b16 %v1943
    %v2041 = vunpack.c.h.b16 %v1943
    %v2042 = vunpack.c.l.b16 %v1944
    %v2043 = vunpack.c.h.b16 %v1944
    %v2044 = vunpack.c.l.b16 %v1945
    %v2045 = vunpack.c.h.b16 %v1945
    %v2046 = vpack.c.b16 %v1998, %v1982
    %v2047 = vpack.c.b16 %v1999, %v1983
    %v2048 = vpack.c.b16 %v2000, %v1984
    %v2049 = vpack.c.b16 %v2001, %v1985
    %v2050 = vpack.c.b16 %v2002, %v1986
    %v2051 = vpack.c.b16 %v2003, %v1987
    %v2052 = vpack.c.b16 %v2004, %v1988
    %v2053 = vpack.c.b16 %v2005, %v1989
    %v2054 = vpack.c.b16 %v2006, %v1990
    %v2055 = vpack.c.b16 %v2007, %v1991
    %v2056 = vpack.c.b16 %v2008, %v1992
    %v2057 = vpack.c.b16 %v2009, %v1993
    %v2058 = vpack.c.b16 %v2010, %v1994
    %v2059 = vpack.c.b16 %v2011, %v1995
    %v2060 = vpack.c.b16 %v2012, %v1996
    %v2061 = vpack.c.b16 %v2013, %v1997
    %v2062 = vpack.c.b16 %v2030, %v2014
    %v2063 = vpack.c.b16 %v2031, %v2015
    %v2064 = vpack.c.b16 %v2032, %v2016
    %v2065 = vpack.c.b16 %v2033, %v2017
    %v2066 = vpack.c.b16 %v2034, %v2018
    %v2067 = vpack.c.b16 %v2035, %v2019
    %v2068 = vpack.c.b16 %v2036, %v2020
    %v2069 = vpack.c.b16 %v2037, %v2021
    %v2070 = vpack.c.b16 %v2038, %v2022
    %v2071 = vpack.c.b16 %v2039, %v2023
    %v2072 = vpack.c.b16 %v2040, %v2024
    %v2073 = vpack.c.b16 %v2041, %v2025
    %v2074 = vpack.c.b16 %v2042, %v2026
    %v2075 = vpack.c.b16 %v2043, %v2027
    %v2076 = vpack.c.b16 %v2044, %v2028
    %v2077 = vpack.c.b16 %v2045, %v2029
    %2110 = vmatprep.subr.bf16.mxu0 %v2047
    %2111 = vmatpush1.bf16.xpose.msra.mxu0 %v2046
    %2112 = vmatprep.subr.bf16.mxu0 %v2063
    %2113 = vmatpush1.bf16.xpose.msra.mxu0 %v2062
    %2114 = vmatprep.subr.bf16.mxu0 0
    %2115 = vmatpush1.bf16.xpose.msra.mxu0 0
    %2116 = vmatprep.subr.bf16.mxu0 0
    %2117 = vmatpush1.bf16.xpose.msra.mxu0 0
    %2118 = vmatprep.subr.bf16.mxu0 0
    %2119 = vmatpush1.bf16.xpose.msra.mxu0 0
    %2120 = vmatprep.subr.bf16.mxu0 0
    %2121 = vmatpush1.bf16.xpose.msra.mxu0 0
    %2122 = vmatprep.subr.bf16.mxu0 0
    %2123 = vmatpush1.bf16.xpose.msra.mxu0 0
    %2124 = vmatprep.subr.bf16.mxu0 0
    %2125 = vmatpush1.bf16.xpose.msra.mxu0 0
    %2126 = vmatprep.subr.bf16.mxu0 0
    %2127 = vmatpush1.bf16.xpose.msra.mxu0 0
    %2128 = vmatprep.subr.bf16.mxu0 0
    %2129 = vmatpush1.bf16.xpose.msra.mxu0 0
    %2130 = vmatprep.subr.bf16.mxu0 0
    %2131 = vmatpush1.bf16.xpose.msra.mxu0 0
    %2132 = vmatprep.subr.bf16.mxu0 0
    %2133 = vmatpush1.bf16.xpose.msra.mxu0 0
    %2134 = vmatprep.subr.bf16.mxu0 0
    %2135 = vmatpush1.bf16.xpose.msra.mxu0 0
    %2136 = vmatprep.subr.bf16.mxu0 0
    %2137 = vmatpush1.bf16.xpose.msra.mxu0 0
    %2138 = vmatprep.subr.bf16.mxu0 0
    %2139 = vmatpush1.bf16.xpose.msra.mxu0 0
    %2140 = vmatprep.subr.bf16.mxu0 0
    %2141 = vmatpush1.bf16.xpose.msra.mxu0 0
    %2142 = vmatprep.mubr.bf16.mxu0 %v1899
    %2143 = vmatmul.mubr.bf16.gmra.mrb[0].mxu0 %v1898
    %v2144 = vpop.f32.mrb[0].mxu0
    %v2145 = vadd.f32 %v1949, %v2144
    %v2146 = vpop.f32.mrb[0].mxu0
    %v2147 = vpop.f32.mrb[0].mxu0
    %v2148 = vadd.f32 %v1949, %v2147
    %v2149 = vpop.f32.mrb[0].mxu0
    %2150 = vdwg.mxu0
    %2151 = vmatprep.subr.bf16.mxu0 %v2049
    %2152 = vmatpush1.bf16.xpose.msra.mxu0 %v2048
    %2153 = vmatprep.subr.bf16.mxu0 %v2065
    %2154 = vmatpush1.bf16.xpose.msra.mxu0 %v2064
    %2155 = vmatprep.subr.bf16.mxu0 0
    %2156 = vmatpush1.bf16.xpose.msra.mxu0 0
    %2157 = vmatprep.subr.bf16.mxu0 0
    %2158 = vmatpush1.bf16.xpose.msra.mxu0 0
    %2159 = vmatprep.subr.bf16.mxu0 0
    %2160 = vmatpush1.bf16.xpose.msra.mxu0 0
    %2161 = vmatprep.subr.bf16.mxu0 0
    %2162 = vmatpush1.bf16.xpose.msra.mxu0 0
    %2163 = vmatprep.subr.bf16.mxu0 0
    %2164 = vmatpush1.bf16.xpose.msra.mxu0 0
    %2165 = vmatprep.subr.bf16.mxu0 0
    %2166 = vmatpush1.bf16.xpose.msra.mxu0 0
    %2167 = vmatprep.subr.bf16.mxu0 0
    %2168 = vmatpush1.bf16.xpose.msra.mxu0 0
    %2169 = vmatprep.subr.bf16.mxu0 0
    %2170 = vmatpush1.bf16.xpose.msra.mxu0 0
    %2171 = vmatprep.subr.bf16.mxu0 0
    %2172 = vmatpush1.bf16.xpose.msra.mxu0 0
    %2173 = vmatprep.subr.bf16.mxu0 0
    %2174 = vmatpush1.bf16.xpose.msra.mxu0 0
    %2175 = vmatprep.subr.bf16.mxu0 0
    %2176 = vmatpush1.bf16.xpose.msra.mxu0 0
    %2177 = vmatprep.subr.bf16.mxu0 0
    %2178 = vmatpush1.bf16.xpose.msra.mxu0 0
    %2179 = vmatprep.subr.bf16.mxu0 0
    %2180 = vmatpush1.bf16.xpose.msra.mxu0 0
    %2181 = vmatprep.subr.bf16.mxu0 0
    %2182 = vmatpush1.bf16.xpose.msra.mxu0 0
    %2183 = vmatprep.mubr.bf16.mxu0 %v1901
    %2184 = vmatmul.mubr.bf16.gmra.mrb[0].mxu0 %v1900
    %v2185 = vpop.f32.mrb[0].mxu0
    %v2186 = vadd.f32 %v2145, %v2185
    %v2187 = vpop.f32.mrb[0].mxu0
    %v2188 = vpop.f32.mrb[0].mxu0
    %v2189 = vadd.f32 %v2148, %v2188
    %v2190 = vpop.f32.mrb[0].mxu0
    %2191 = vdwg.mxu0
    %2192 = vmatprep.subr.bf16.mxu0 %v2051
    %2193 = vmatpush1.bf16.xpose.msra.mxu0 %v2050
    %2194 = vmatprep.subr.bf16.mxu0 %v2067
    %2195 = vmatpush1.bf16.xpose.msra.mxu0 %v2066
    %2196 = vmatprep.subr.bf16.mxu0 0
    %2197 = vmatpush1.bf16.xpose.msra.mxu0 0
    %2198 = vmatprep.subr.bf16.mxu0 0
    %2199 = vmatpush1.bf16.xpose.msra.mxu0 0
    %2200 = vmatprep.subr.bf16.mxu0 0
    %2201 = vmatpush1.bf16.xpose.msra.mxu0 0
    %2202 = vmatprep.subr.bf16.mxu0 0
    %2203 = vmatpush1.bf16.xpose.msra.mxu0 0
    %2204 = vmatprep.subr.bf16.mxu0 0
    %2205 = vmatpush1.bf16.xpose.msra.mxu0 0
    %2206 = vmatprep.subr.bf16.mxu0 0
    %2207 = vmatpush1.bf16.xpose.msra.mxu0 0
    %2208 = vmatprep.subr.bf16.mxu0 0
    %2209 = vmatpush1.bf16.xpose.msra.mxu0 0
    %2210 = vmatprep.subr.bf16.mxu0 0
    %2211 = vmatpush1.bf16.xpose.msra.mxu0 0
    %2212 = vmatprep.subr.bf16.mxu0 0
    %2213 = vmatpush1.bf16.xpose.msra.mxu0 0
    %2214 = vmatprep.subr.bf16.mxu0 0
    %2215 = vmatpush1.bf16.xpose.msra.mxu0 0
    %2216 = vmatprep.subr.bf16.mxu0 0
    %2217 = vmatpush1.bf16.xpose.msra.mxu0 0
    %2218 = vmatprep.subr.bf16.mxu0 0
    %2219 = vmatpush1.bf16.xpose.msra.mxu0 0
    %2220 = vmatprep.subr.bf16.mxu0 0
    %2221 = vmatpush1.bf16.xpose.msra.mxu0 0
    %2222 = vmatprep.subr.bf16.mxu0 0
    %2223 = vmatpush1.bf16.xpose.msra.mxu0 0
    %2224 = vmatprep.mubr.bf16.mxu0 %v1903
    %2225 = vmatmul.mubr.bf16.gmra.mrb[0].mxu0 %v1902
    %v2226 = vpop.f32.mrb[0].mxu0
    %v2227 = vadd.f32 %v2186, %v2226
    %v2228 = vpop.f32.mrb[0].mxu0
    %v2229 = vpop.f32.mrb[0].mxu0
    %v2230 = vadd.f32 %v2189, %v2229
    %v2231 = vpop.f32.mrb[0].mxu0
    %2232 = vdwg.mxu0
    %2233 = vmatprep.subr.bf16.mxu0 %v2053
    %2234 = vmatpush1.bf16.xpose.msra.mxu0 %v2052
    %2235 = vmatprep.subr.bf16.mxu0 %v2069
    %2236 = vmatpush1.bf16.xpose.msra.mxu0 %v2068
    %2237 = vmatprep.subr.bf16.mxu0 0
    %2238 = vmatpush1.bf16.xpose.msra.mxu0 0
    %2239 = vmatprep.subr.bf16.mxu0 0
    %2240 = vmatpush1.bf16.xpose.msra.mxu0 0
    %2241 = vmatprep.subr.bf16.mxu0 0
    %2242 = vmatpush1.bf16.xpose.msra.mxu0 0
    %2243 = vmatprep.subr.bf16.mxu0 0
    %2244 = vmatpush1.bf16.xpose.msra.mxu0 0
    %2245 = vmatprep.subr.bf16.mxu0 0
    %2246 = vmatpush1.bf16.xpose.msra.mxu0 0
    %2247 = vmatprep.subr.bf16.mxu0 0
    %2248 = vmatpush1.bf16.xpose.msra.mxu0 0
    %2249 = vmatprep.subr.bf16.mxu0 0
    %2250 = vmatpush1.bf16.xpose.msra.mxu0 0
    %2251 = vmatprep.subr.bf16.mxu0 0
    %2252 = vmatpush1.bf16.xpose.msra.mxu0 0
    %2253 = vmatprep.subr.bf16.mxu0 0
    %2254 = vmatpush1.bf16.xpose.msra.mxu0 0
    %2255 = vmatprep.subr.bf16.mxu0 0
    %2256 = vmatpush1.bf16.xpose.msra.mxu0 0
    %2257 = vmatprep.subr.bf16.mxu0 0
    %2258 = vmatpush1.bf16.xpose.msra.mxu0 0
    %2259 = vmatprep.subr.bf16.mxu0 0
    %2260 = vmatpush1.bf16.xpose.msra.mxu0 0
    %2261 = vmatprep.subr.bf16.mxu0 0
    %2262 = vmatpush1.bf16.xpose.msra.mxu0 0
    %2263 = vmatprep.subr.bf16.mxu0 0
    %2264 = vmatpush1.bf16.xpose.msra.mxu0 0
    %2265 = vmatprep.mubr.bf16.mxu0 %v1905
    %2266 = vmatmul.mubr.bf16.gmra.mrb[0].mxu0 %v1904
    %v2267 = vpop.f32.mrb[0].mxu0
    %v2268 = vadd.f32 %v2227, %v2267
    %v2269 = vpop.f32.mrb[0].mxu0
    %v2270 = vpop.f32.mrb[0].mxu0
    %v2271 = vadd.f32 %v2230, %v2270
    %v2272 = vpop.f32.mrb[0].mxu0
    %2273 = vdwg.mxu0
    %2274 = vmatprep.subr.bf16.mxu0 %v2055
    %2275 = vmatpush1.bf16.xpose.msra.mxu0 %v2054
    %2276 = vmatprep.subr.bf16.mxu0 %v2071
    %2277 = vmatpush1.bf16.xpose.msra.mxu0 %v2070
    %2278 = vmatprep.subr.bf16.mxu0 0
    %2279 = vmatpush1.bf16.xpose.msra.mxu0 0
    %2280 = vmatprep.subr.bf16.mxu0 0
    %2281 = vmatpush1.bf16.xpose.msra.mxu0 0
    %2282 = vmatprep.subr.bf16.mxu0 0
    %2283 = vmatpush1.bf16.xpose.msra.mxu0 0
    %2284 = vmatprep.subr.bf16.mxu0 0
    %2285 = vmatpush1.bf16.xpose.msra.mxu0 0
    %2286 = vmatprep.subr.bf16.mxu0 0
    %2287 = vmatpush1.bf16.xpose.msra.mxu0 0
    %2288 = vmatprep.subr.bf16.mxu0 0
    %2289 = vmatpush1.bf16.xpose.msra.mxu0 0
    %2290 = vmatprep.subr.bf16.mxu0 0
    %2291 = vmatpush1.bf16.xpose.msra.mxu0 0
    %2292 = vmatprep.subr.bf16.mxu0 0
    %2293 = vmatpush1.bf16.xpose.msra.mxu0 0
    %2294 = vmatprep.subr.bf16.mxu0 0
    %2295 = vmatpush1.bf16.xpose.msra.mxu0 0
    %2296 = vmatprep.subr.bf16.mxu0 0
    %2297 = vmatpush1.bf16.xpose.msra.mxu0 0
    %2298 = vmatprep.subr.bf16.mxu0 0
    %2299 = vmatpush1.bf16.xpose.msra.mxu0 0
    %2300 = vmatprep.subr.bf16.mxu0 0
    %2301 = vmatpush1.bf16.xpose.msra.mxu0 0
    %2302 = vmatprep.subr.bf16.mxu0 0
    %2303 = vmatpush1.bf16.xpose.msra.mxu0 0
    %2304 = vmatprep.subr.bf16.mxu0 0
    %2305 = vmatpush1.bf16.xpose.msra.mxu0 0
    %2306 = vmatprep.mubr.bf16.mxu0 %v1907
    %2307 = vmatmul.mubr.bf16.gmra.mrb[0].mxu0 %v1906
    %v2308 = vpop.f32.mrb[0].mxu0
    %v2309 = vadd.f32 %v2268, %v2308
    %v2310 = vpop.f32.mrb[0].mxu0
    %v2311 = vpop.f32.mrb[0].mxu0
    %v2312 = vadd.f32 %v2271, %v2311
    %v2313 = vpop.f32.mrb[0].mxu0
    %2314 = vdwg.mxu0
    %2315 = vmatprep.subr.bf16.mxu0 %v2057
    %2316 = vmatpush1.bf16.xpose.msra.mxu0 %v2056
    %2317 = vmatprep.subr.bf16.mxu0 %v2073
    %2318 = vmatpush1.bf16.xpose.msra.mxu0 %v2072
    %2319 = vmatprep.subr.bf16.mxu0 0
    %2320 = vmatpush1.bf16.xpose.msra.mxu0 0
    %2321 = vmatprep.subr.bf16.mxu0 0
    %2322 = vmatpush1.bf16.xpose.msra.mxu0 0
    %2323 = vmatprep.subr.bf16.mxu0 0
    %2324 = vmatpush1.bf16.xpose.msra.mxu0 0
    %2325 = vmatprep.subr.bf16.mxu0 0
    %2326 = vmatpush1.bf16.xpose.msra.mxu0 0
    %2327 = vmatprep.subr.bf16.mxu0 0
    %2328 = vmatpush1.bf16.xpose.msra.mxu0 0
    %2329 = vmatprep.subr.bf16.mxu0 0
    %2330 = vmatpush1.bf16.xpose.msra.mxu0 0
    %2331 = vmatprep.subr.bf16.mxu0 0
    %2332 = vmatpush1.bf16.xpose.msra.mxu0 0
    %2333 = vmatprep.subr.bf16.mxu0 0
    %2334 = vmatpush1.bf16.xpose.msra.mxu0 0
    %2335 = vmatprep.subr.bf16.mxu0 0
    %2336 = vmatpush1.bf16.xpose.msra.mxu0 0
    %2337 = vmatprep.subr.bf16.mxu0 0
    %2338 = vmatpush1.bf16.xpose.msra.mxu0 0
    %2339 = vmatprep.subr.bf16.mxu0 0
    %2340 = vmatpush1.bf16.xpose.msra.mxu0 0
    %2341 = vmatprep.subr.bf16.mxu0 0
    %2342 = vmatpush1.bf16.xpose.msra.mxu0 0
    %2343 = vmatprep.subr.bf16.mxu0 0
    %2344 = vmatpush1.bf16.xpose.msra.mxu0 0
    %2345 = vmatprep.subr.bf16.mxu0 0
    %2346 = vmatpush1.bf16.xpose.msra.mxu0 0
    %2347 = vmatprep.mubr.bf16.mxu0 %v1909
    %2348 = vmatmul.mubr.bf16.gmra.mrb[0].mxu0 %v1908
    %v2349 = vpop.f32.mrb[0].mxu0
    %v2350 = vadd.f32 %v2309, %v2349
    %v2351 = vpop.f32.mrb[0].mxu0
    %v2352 = vpop.f32.mrb[0].mxu0
    %v2353 = vadd.f32 %v2312, %v2352
    %v2354 = vpop.f32.mrb[0].mxu0
    %2355 = vdwg.mxu0
    %2356 = vmatprep.subr.bf16.mxu0 %v2059
    %2357 = vmatpush1.bf16.xpose.msra.mxu0 %v2058
    %2358 = vmatprep.subr.bf16.mxu0 %v2075
    %2359 = vmatpush1.bf16.xpose.msra.mxu0 %v2074
    %2360 = vmatprep.subr.bf16.mxu0 0
    %2361 = vmatpush1.bf16.xpose.msra.mxu0 0
    %2362 = vmatprep.subr.bf16.mxu0 0
    %2363 = vmatpush1.bf16.xpose.msra.mxu0 0
    %2364 = vmatprep.subr.bf16.mxu0 0
    %2365 = vmatpush1.bf16.xpose.msra.mxu0 0
    %2366 = vmatprep.subr.bf16.mxu0 0
    %2367 = vmatpush1.bf16.xpose.msra.mxu0 0
    %2368 = vmatprep.subr.bf16.mxu0 0
    %2369 = vmatpush1.bf16.xpose.msra.mxu0 0
    %2370 = vmatprep.subr.bf16.mxu0 0
    %2371 = vmatpush1.bf16.xpose.msra.mxu0 0
    %2372 = vmatprep.subr.bf16.mxu0 0
    %2373 = vmatpush1.bf16.xpose.msra.mxu0 0
    %2374 = vmatprep.subr.bf16.mxu0 0
    %2375 = vmatpush1.bf16.xpose.msra.mxu0 0
    %2376 = vmatprep.subr.bf16.mxu0 0
    %2377 = vmatpush1.bf16.xpose.msra.mxu0 0
    %2378 = vmatprep.subr.bf16.mxu0 0
    %2379 = vmatpush1.bf16.xpose.msra.mxu0 0
    %2380 = vmatprep.subr.bf16.mxu0 0
    %2381 = vmatpush1.bf16.xpose.msra.mxu0 0
    %2382 = vmatprep.subr.bf16.mxu0 0
    %2383 = vmatpush1.bf16.xpose.msra.mxu0 0
    %2384 = vmatprep.subr.bf16.mxu0 0
    %2385 = vmatpush1.bf16.xpose.msra.mxu0 0
    %2386 = vmatprep.subr.bf16.mxu0 0
    %2387 = vmatpush1.bf16.xpose.msra.mxu0 0
    %2388 = vmatprep.mubr.bf16.mxu0 %v1911
    %2389 = vmatmul.mubr.bf16.gmra.mrb[0].mxu0 %v1910
    %v2390 = vpop.f32.mrb[0].mxu0
    %v2391 = vadd.f32 %v2350, %v2390
    %v2392 = vpop.f32.mrb[0].mxu0
    %v2393 = vpop.f32.mrb[0].mxu0
    %v2394 = vadd.f32 %v2353, %v2393
    %v2395 = vpop.f32.mrb[0].mxu0
    %2396 = vdwg.mxu0
    %2397 = vmatprep.subr.bf16.mxu0 %v2061
    %2398 = vmatpush1.bf16.xpose.msra.mxu0 %v2060
    %2399 = vmatprep.subr.bf16.mxu0 %v2077
    %2400 = vmatpush1.bf16.xpose.msra.mxu0 %v2076
    %2401 = vmatprep.subr.bf16.mxu0 0
    %2402 = vmatpush1.bf16.xpose.msra.mxu0 0
    %2403 = vmatprep.subr.bf16.mxu0 0
    %2404 = vmatpush1.bf16.xpose.msra.mxu0 0
    %2405 = vmatprep.subr.bf16.mxu0 0
    %2406 = vmatpush1.bf16.xpose.msra.mxu0 0
    %2407 = vmatprep.subr.bf16.mxu0 0
    %2408 = vmatpush1.bf16.xpose.msra.mxu0 0
    %2409 = vmatprep.subr.bf16.mxu0 0
    %2410 = vmatpush1.bf16.xpose.msra.mxu0 0
    %2411 = vmatprep.subr.bf16.mxu0 0
    %2412 = vmatpush1.bf16.xpose.msra.mxu0 0
    %2413 = vmatprep.subr.bf16.mxu0 0
    %2414 = vmatpush1.bf16.xpose.msra.mxu0 0
    %2415 = vmatprep.subr.bf16.mxu0 0
    %2416 = vmatpush1.bf16.xpose.msra.mxu0 0
    %2417 = vmatprep.subr.bf16.mxu0 0
    %2418 = vmatpush1.bf16.xpose.msra.mxu0 0
    %2419 = vmatprep.subr.bf16.mxu0 0
    %2420 = vmatpush1.bf16.xpose.msra.mxu0 0
    %2421 = vmatprep.subr.bf16.mxu0 0
    %2422 = vmatpush1.bf16.xpose.msra.mxu0 0
    %2423 = vmatprep.subr.bf16.mxu0 0
    %2424 = vmatpush1.bf16.xpose.msra.mxu0 0
    %2425 = vmatprep.subr.bf16.mxu0 0
    %2426 = vmatpush1.bf16.xpose.msra.mxu0 0
    %2427 = vmatprep.subr.bf16.mxu0 0
    %2428 = vmatpush1.bf16.xpose.msra.mxu0 0
    %2429 = vmatprep.mubr.bf16.mxu0 %v1913
    %2430 = vmatmul.mubr.bf16.gmra.mrb[0].mxu0 %v1912
    %v2431 = vpop.f32.mrb[0].mxu0
    %v2432 = vadd.f32 %v2391, %v2431
    %v2433 = vpop.f32.mrb[0].mxu0
    %v2434 = vpop.f32.mrb[0].mxu0
    %v2435 = vadd.f32 %v2394, %v2434
    %v2436 = vpop.f32.mrb[0].mxu0
    %2437 = vdwg.mxu0
    %v2438 = vadd.f32 %v1240, %v2432
    %v2439 = vadd.f32 %v1241, %v2435
    %v2440 = vsel %vm149, %v2438, 0.0
    %2441 = vadd.xlane.f32.xlu0 %v2440
    %v2442 = vpop.xlane.xlu0 %2441
    %v2443 = vsel %vm149, %v2439, 0.0
    %2444 = vadd.xlane.f32.xlu0 %v2443
    %v2445 = vpop.xlane.xlu0 %2444
    %v2446 = vmul.f32 %v2442, %v1209
    %v2447 = vmul.f32 %v2445, %v1209
    %v2448 = vsub.f32 %v2438, %v2446
    %v2449 = vsub.f32 %v2439, %v2447
    %v2450 = vmul.f32 %v2448, %v2448
    %v2451 = vmul.f32 %v2449, %v2449
    %v2452 = vsel %vm149, %v2450, 0.0
    %2453 = vadd.xlane.f32.xlu0 %v2452
    %v2454 = vpop.xlane.xlu0 %2453
    %v2455 = vsel %vm149, %v2451, 0.0
    %2456 = vadd.xlane.f32.xlu0 %v2455
    %v2457 = vpop.xlane.xlu0 %2456
    %v2458 = vmul.f32 %v2454, %v1209
    %v2459 = vmul.f32 %v2457, %v1209
    %v2460 = vadd.f32 %v2458, 1e-05
    %v2461 = vadd.f32 %v2459, 1e-05
    %v2462 = vrsqrt.pop %v2460
    %v2463 = vrsqrt.pop %v2461
    %v2464 = vmul.f32 %v2448, %v2462
    %v2465 = vmul.f32 %v2449, %v2463
    %v2466 = vlaneseq
    %v2467 = vshrl.u32 %v2466, 7
    %v2468 = vsub.s32 0, %v2467
    %v2469 = vrot.slane %v127, %v2468
    %v2470 = vmul.f32 %v2464, %v2469
    %v2471 = vmul.f32 %v2465, %v2469
    %v2472 = vlaneseq
    %v2473 = vshrl.u32 %v2472, 7
    %v2474 = vsub.s32 1, %v2473
    %v2475 = vrot.slane %v127, %v2474
    %v2476 = vadd.f32 %v2470, %v2475
    %v2477 = vadd.f32 %v2471, %v2475
    %2478 = vst.msk [vmem:[#allocation14] sm:$0xff] %vm149, %v2476
    %2479 = vst.msk [vmem:[#allocation14 + $0x8] sm:$0xff] %vm149, %v2477
    // Predicated region
    $region62: #{trans_backbone.1} parent=1 // pred_check
      _
    $region63: #{trans_backbone.1} parent=1 // pred_check_branch
      %2481 = sbr.rel (0) target = $region65
    $region64: #{trans_backbone.1} parent=1 // pred_region
      %s2483 = ssub.s32 256, 256
      %2484 = vsyncadd [#allocation4], %s2483
      %s2485 = sshll.u32 [#allocation14], 4
      %s2486 = int_to_ptr.vmem [resolvable:$true] %s2485
      %2491 = dma.vmem_to_hbm [thread:$0]  %s2486, 256, %s8, [#allocation4], 128, 128, 8
    $region65: #{trans_backbone.1} parent=1 // pred_fallthru
      _
    // Predicated region
    $region66: #{trans_backbone.1} parent=1 // pred_check
      _
    $region67: #{trans_backbone.1} parent=1 // pred_check_branch
      %2493 = sbr.rel (0) target = $region69
    $region68: #{trans_backbone.1} parent=1 // pred_region
      %2494 = dma.done [#allocation4], 256
    $region69: #{trans_backbone.1} parent=1 // pred_fallthru
      _
    %2495 = vsyncpa [#allocation3], 1
    %2496 = vsyncpa [#allocation6], 1
    %2497 = vsyncpa [#allocation9], 1
    %2498 = vsyncpa [#allocation12], 1
    %2499 = vsyncpa [#allocation4], 1

</llo_original>
